<compile_context>
chip_gen: v5e
topology: v5e:2x2
jax: 0.10.0
libtpu: 0.0.40
codegen_flags: <defaults>
</compile_context>

<pallas_src>
import functools

import numpy as np
import jax
import jax.numpy as jnp
from jax import lax
from jax.experimental import pallas as pl
from jax.experimental.pallas import tpu as pltpu

EMBED_CH = 8
NUM_CLASSES = 1 + EMBED_CH
COUT = 16               # backbone output channels (8 emb + 1 conf + 7 pad), sublane dim
CONF_ROW = 8            # confidence channel row inside the (N, 16, HW) feature map
MAX_GROUPS = 8          # lane-group padding (stabilizes disc-kernel shapes)
DELTA_V = 0.2
DELTA_D = 1.2


# ----------------------------------------------------------------------------
# Backbone: fused im2col 3x3 conv (one K=27 matmul) + ReLU + 1x1 conv, bf16 MXU,
# channel-major lane-dense output.
# ----------------------------------------------------------------------------
def _backbone_kernel(x_ref, w1_ref, b1_ref, w2t_ref, b2_ref, o_ref):
    # x_ref  : (1, H+2, W+2, Cin) f32 padded NHWC sample (resident across row tiles)
    # w1_ref : (9*Cin, HID) bf16     b1_ref : (1, HID) f32
    # w2t_ref: (COUT, HID)  bf16     b2_ref : (COUT, 1) f32
    # o_ref  : (1, COUT, th*W) f32   channel-major, HW on the lane axis
    tpix = o_ref.shape[2]
    cin = x_ref.shape[3]
    w = x_ref.shape[2] - 2
    th = tpix // w
    h0 = pl.multiple_of(pl.program_id(1) * th, th)

    # im2col in VMEM: nine shifted (th, W, Cin) windows -> one (th*W, 9*Cin)
    # patch tile -> a single MXU matmul (replaces nine K=3 matmuls).
    wins = []
    for ky in range(3):
        for kx in range(3):
            win = x_ref[0, pl.ds(h0 + ky, th), pl.ds(kx, w), :]      # (th, w, cin)
            wins.append(win.reshape(th * w, cin))                    # W % 8 == 0 => trivial
    patches = jnp.concatenate(wins, axis=1).astype(jnp.bfloat16)     # (th*w, 9*cin)

    acc = jnp.dot(patches, w1_ref[...], preferred_element_type=jnp.float32)
    hact = jnp.maximum(acc + b1_ref[...], 0.0).astype(jnp.bfloat16)  # (th*w, hid)

    # (COUT, hid) x (th*w, hid)^T -> (COUT, th*w): channel-major output comes
    # straight off the MXU, no in-kernel transpose needed.
    out_t = lax.dot_general(w2t_ref[...], hact, (((1,), (1,)), ((), ())),
                            preferred_element_type=jnp.float32)
    o_ref[0] = out_t + b2_ref[...]


def _pick_row_tile(h, w, row_cap=2048):
    # largest divisor th of H with th*W a lane-aligned multiple of 128 and a
    # modest row cap (keeps per-step VMEM well under v5e's 16 MiB default).
    best = None
    for d in range(1, h + 1):
        if h % d:
            continue
        if (d * w) % 128 == 0 and d * w <= row_cap:
            best = d
    return best if best is not None else h   # full-dim block is always legal


def backbone_forward(x_nchw, w1, b1, w2t, b2):
    """Fused 3x3 conv -> ReLU -> 1x1 conv.  Returns (N, COUT, H*W) f32."""
    N, C, H, W = x_nchw.shape
    assert W % 8 == 0, "backbone stand-in expects W to be a multiple of 8"
    assert w1.shape[0] == 9 * C
    hid = w1.shape[1]
    HW = H * W

    # one layout conversion at entry; input stays f32 (3 channels is tiny next
    # to the 16-channel output traffic).
    x = jnp.transpose(x_nchw, (0, 2, 3, 1)).astype(jnp.float32)
    xp = jnp.pad(x, ((0, 0), (1, 1), (1, 1), (0, 0)))

    th = _pick_row_tile(H, W)
    ht = H // th

    return pl.pallas_call(
        _backbone_kernel,
        out_shape=jax.ShapeDtypeStruct((N, COUT, HW), jnp.float32),
        grid=(N, ht),
        in_specs=[
            # full padded sample; block index ignores the row-tile axis, so the
            # sample is DMA'd once per n and re-used across all row tiles.
            pl.BlockSpec((1, H + 2, W + 2, C), lambda n, t: (n, 0, 0, 0)),
            pl.BlockSpec((9 * C, hid), lambda n, t: (0, 0)),
            pl.BlockSpec((1, hid), lambda n, t: (0, 0)),
            pl.BlockSpec((COUT, hid), lambda n, t: (0, 0)),
            pl.BlockSpec((COUT, 1), lambda n, t: (0, 0)),
        ],
        out_specs=pl.BlockSpec((1, COUT, th * W), lambda n, t: (n, 0, t)),
        # disjoint output blocks, no accumulator -> both axes shardable across
        # v7x's two TensorCores.
        compiler_params=pltpu.CompilerParams(
            dimension_semantics=("parallel", "parallel")),
    )(xp, w1, b1, w2t, b2)


# ----------------------------------------------------------------------------
# BCE-with-logits (mean reduction): reads the confidence row directly from the
# channel-major feature map (no slice/pad copies), per-sample output-resident
# accumulator, sample axis parallel (v7x two-core sharding).
# ----------------------------------------------------------------------------
def _bce_kernel(x_ref, z_ref, o_ref):
    @pl.when(pl.program_id(1) == 0)
    def _init():
        o_ref[...] = jnp.zeros_like(o_ref)

    x = x_ref[0, 0]                                   # (tile_r, 128)
    z = z_ref[0]                                      # (tile_r, 128)
    # numerically stable: max(x,0) - x*z + log(1 + exp(-|x|))
    # (log(1+t) for t=exp(-|x|) in (0,1]; the log1p delta is < 6e-8 per elem)
    loss = jnp.maximum(x, 0.0) - x * z + jnp.log(1.0 + jnp.exp(-jnp.abs(x)))
    o_ref[0] += jnp.sum(loss, axis=0, keepdims=True)


def _pick_bce_tile(hwr, cap=512):
    best = None
    for d in range(1, hwr + 1):
        if hwr % d == 0 and d % 8 == 0 and d <= cap:
            best = d
    return best if best is not None else hwr          # full-dim block fallback


def bce_with_logits_mean(feat_sel, tgt_conf_np):
    # feat_sel: (Ns, COUT, HW) f32 device array; tgt_conf_np: (Ns, H, W) numpy.
    Ns, Cp, HW = feat_sel.shape
    assert HW % 128 == 0, "feature-map H*W must be a multiple of 128"
    hwr = HW // 128
    tile_r = _pick_bce_tile(hwr)
    nt = hwr // tile_r

    logits4 = feat_sel.reshape(Ns, Cp, hwr, 128)                      # free reshape
    z = jnp.asarray(tgt_conf_np.reshape(Ns, hwr, 128), jnp.float32)

    out = pl.pallas_call(
        _bce_kernel,
        out_shape=jax.ShapeDtypeStruct((Ns, 1, 128), jnp.float32),
        grid=(Ns, nt),
        in_specs=[
            # pick the confidence channel (element CONF_ROW) straight from the
            # channel-major feature map -- no wrapper-side slice copy.
            pl.BlockSpec((1, 1, tile_r, 128), lambda n, t: (n, CONF_ROW, t, 0)),
            pl.BlockSpec((1, tile_r, 128), lambda n, t: (n, t, 0)),
        ],
        out_specs=pl.BlockSpec((1, 1, 128), lambda n, t: (n, 0, 0)),
        compiler_params=pltpu.CompilerParams(
            dimension_semantics=("parallel", "arbitrary")),
    )(logits4, z)
    return out.sum() / float(Ns * HW)


# ----------------------------------------------------------------------------
# Discriminative loss: one grid step per sample.  In-kernel one-hot from an
# int32 label map, MXU for centers and the point<->center cross term, packed
# (1, 128) scalar output per sample.
# ----------------------------------------------------------------------------
def _disc_kernel(gnum_ref, feat_ref, lab_ref, out_ref, *, g_pad):
    pred = feat_ref[0, :EMBED_CH, :]                    # (C, HW)  HW on lanes
    lab = lab_ref[0]                                    # (1, HW)  int32, -1 = no point
    gnum = gnum_ref[0]                                  # true (batch-max) group count

    gidx = lax.broadcasted_iota(jnp.int32, (g_pad, lab.shape[1]), 0)
    gt = (gidx == lab).astype(jnp.float32)              # (G, HW) one-hot rows

    point_num = jnp.sum(gt, axis=1, keepdims=True)      # (G, 1)
    has_point = (point_num > 0.0).astype(jnp.float32)   # (G, 1)
    n_groups = jnp.sum(has_point)

    # group centers on the MXU: (G, HW) x (C, HW)^T -> (G, C)
    center = lax.dot_general(gt, pred, (((1,), (1,)), ((), ())),
                             preferred_element_type=jnp.float32)
    center = center / (point_num + 1e-5)

    # ||c - p||^2 = ||c||^2 + ||p||^2 - 2 c.p  -> no (G, HW, C) intermediate
    cp = jnp.dot(center, pred, preferred_element_type=jnp.float32)   # (G, HW)
    p_sq = jnp.sum(pred * pred, axis=0, keepdims=True)               # (1, HW)
    c_sq = jnp.sum(center * center, axis=1, keepdims=True)           # (G, 1)
    # NOTE: forward-only; if differentiated, add an epsilon inside the sqrt.
    dist = jnp.sqrt(jnp.maximum(c_sq + p_sq - 2.0 * cp, 0.0))        # (G, HW)
    sum_var = jnp.sum(jnp.maximum(dist - DELTA_V, 0.0) ** 2 * gt)

    # center-to-center distances: tiny (G, G, C); diagonal included and rows
    # masked by has_point only, exactly as in the reference.  Columns beyond
    # the true group count exist only because of the fixed-G padding.
    cdiff = center[:, None, :] - center[None, :, :]                   # (G, G, C)
    cdist = jnp.sqrt(jnp.sum(cdiff * cdiff, axis=-1))                 # (G, G)
    col_valid = (lax.broadcasted_iota(jnp.int32, (1, g_pad), 1)
                 < gnum).astype(jnp.float32)                          # (1, G)
    sum_dist = jnp.sum(jnp.maximum(DELTA_D - cdist, 0.0) ** 2
                       * has_point * col_valid)

    csum = jnp.sum(center, axis=1, keepdims=True)                     # (G, 1)
    reg = jnp.sum(has_point * csum * csum) * 0.001

    # pack the four per-sample scalars into one lane-dense (1, 128) row
    lane = lax.broadcasted_iota(jnp.int32, (1, 128), 1)
    out_ref[0] = (jnp.where(lane == 0, sum_var, 0.0)
                  + jnp.where(lane == 1, sum_dist, 0.0)
                  + jnp.where(lane == 2, reg, 0.0)
                  + jnp.where(lane == 3, n_groups, 0.0))


def discriminative_loss_pallas(feat_sel, labels, group_num, g_pad):
    # feat_sel: (Ns, COUT, HW) f32 ; labels: (Ns, 1, HW) int32 (-1 = no point)
    Ns, Cp, HW = feat_sel.shape
    out = pl.pallas_call(
        functools.partial(_disc_kernel, g_pad=g_pad),
        out_shape=jax.ShapeDtypeStruct((Ns, 1, 128), jnp.float32),
        grid_spec=pltpu.PrefetchScalarGridSpec(
            num_scalar_prefetch=1,
            grid=(Ns,),
            in_specs=[pl.BlockSpec((1, Cp, HW), lambda n, gn: (n, 0, 0)),
                      pl.BlockSpec((1, 1, HW), lambda n, gn: (n, 0, 0))],
            out_specs=pl.BlockSpec((1, 1, 128), lambda n, gn: (n, 0, 0))),
        # per-sample steps are independent -> shard across TCs on v7x
        compiler_params=pltpu.CompilerParams(dimension_semantics=("parallel",)),
    )(jnp.asarray([group_num], jnp.int32), feat_sel, labels)

    res = out[:, 0, :]
    sum_var, sum_dist, reg, n_groups = res[:, 0], res[:, 1], res[:, 2], res[:, 3]
    # Reproduce the reference broadcasting exactly: (Ns,) / (Ns,1) -> (Ns,Ns) mean.
    ng_col = n_groups[:, None]
    loss_var = (sum_var / ng_col).mean()
    loss_dist = (sum_dist / jnp.maximum(ng_col * (ng_col - 1.0), 1.0)).mean()
    loss_reg = reg.sum()
    return {'dist': loss_dist, 'var': loss_var * 0.01, 'reg': loss_reg}


# ----------------------------------------------------------------------------
# LaneNet wrapper
# ----------------------------------------------------------------------------
class LaneNetPallas:
    def __init__(self, input_size=(16, 16), embedding_channels=EMBED_CH,
                 hidden=32, seed=0):
        assert embedding_channels == EMBED_CH
        self.embedding_channels = embedding_channels
        self.fm_h, self.fm_w = input_size     # stand-in backbone preserves resolution
        k1, k2 = jax.random.split(jax.random.PRNGKey(seed))
        w1 = jax.random.normal(k1, (9 * 3, hidden), jnp.float32) * 0.1
        w2 = jax.random.normal(k2, (hidden, NUM_CLASSES), jnp.float32) * 0.1
        # channel order of the backbone output: rows 0..7 embedding, row 8 conf
        w2t = jnp.zeros((COUT, hidden), jnp.float32)
        w2t = w2t.at[:EMBED_CH, :].set(w2[:, 1:1 + EMBED_CH].T)
        w2t = w2t.at[CONF_ROW, :].set(w2[:, 0])
        self.w1 = w1.astype(jnp.bfloat16)                 # (27, hidden)
        self.b1 = jnp.zeros((1, hidden), jnp.float32)
        self.w2t = w2t.astype(jnp.bfloat16)               # (16, hidden)
        self.b2 = jnp.zeros((COUT, 1), jnp.float32)
        self.training = True

    @staticmethod
    def encode(targets_list, fm_h, fm_w):
        # Host-side rasterization (numpy), mirrors the torch.no_grad() encode.
        # np.interp is used in place of scipy interp1d(kind='linear').
        y_samples = np.arange(0, fm_h)
        target = np.zeros((len(targets_list), 3, fm_h, fm_w), dtype=np.float64)
        for i, lane_group in enumerate(targets_list):
            lane_id = 1
            for lane in lane_group:
                lane = np.asarray(lane, dtype=np.float64)
                xs, ys = lane[:, 0], lane[:, 1]
                ys, index = np.unique(ys, return_index=True)
                xs = np.array(xs)[index]
                if len(xs) < 2:
                    continue
                point_min_y, point_max_y = ys.min() * fm_h, ys.max() * fm_h
                points_y = y_samples[(y_samples >= point_min_y) & (y_samples <= point_max_y)]
                points_x = np.interp(points_y / fm_h, ys, xs) * fm_w
                points_x_index = np.round(points_x).astype(np.int64)
                m = (points_x_index < fm_w) & (points_x_index >= 0)
                if m.sum() < 2:
                    continue
                points_x, points_y, points_x_index = points_x[m], points_y[m], points_x_index[m]
                points_x_offset = points_x - points_x_index
                target[i, 0, points_y, points_x_index] = 1
                target[i, 1, points_y, points_x_index] = lane_id
                target[i, 2, points_y, points_x_index] = points_x_offset
                lane_id += 1
        return target.astype(np.float32)

    def compute_loss(self, feat, targets_np):
        # feat: (N, COUT, HW) channel-major; targets_np: (N, 3, H, W) numpy
        N, Cp, HW = feat.shape
        mask_b = targets_np[:, 0].reshape(N, -1).sum(axis=1) != 0
        if mask_b.sum() == 0:
            z = jnp.abs(feat).sum() * 0.0
            return {'loc': z, 'conf': z}
        idx = np.nonzero(mask_b)[0]
        feat_sel = feat[jnp.asarray(idx)]                 # (Ns, COUT, HW)
        tgt_sel = targets_np[idx]                         # (Ns, 3, H, W) numpy
        Ns = len(idx)

        conf = bce_with_logits_mean(feat_sel, tgt_sel[:, 0]).reshape(1)

        # host-side group prep (corresponds to the torch.no_grad() block):
        # labels in [-1, group_num): -1 marks "no point"; one-hot is built
        # in-kernel from this compact int32 map.
        pmask = tgt_sel[:, 0] > 0
        labels = np.where(pmask, tgt_sel[:, 1].astype(np.int64) - 1, -1)
        group_num = int(labels.max()) + 1
        g_pad = int(max(MAX_GROUPS, ((group_num + 7) // 8) * 8))
        labels = labels.reshape(Ns, 1, HW).astype(np.int32)

        loss = {'conf': conf}
        loss.update(discriminative_loss_pallas(
            feat_sel, jnp.asarray(labels), group_num, g_pad))
        return loss

    def forward(self, x, targets=None):
        feat = backbone_forward(x, self.w1, self.b1, self.w2t, self.b2)  # (N, 16, HW)
        if self.training:
            tgt = self.encode(targets['lane'], self.fm_h, self.fm_w)
            return self.compute_loss(feat, tgt)
        # reference eval branch returns None; return NCHW preds (conf first,
        # then embedding) for usability
        conf = feat[:, CONF_ROW:CONF_ROW + 1, :]
        emb = feat[:, :EMBED_CH, :]
        return jnp.concatenate([conf, emb], axis=1).reshape(
            x.shape[0], NUM_CLASSES, self.fm_h, self.fm_w)


if __name__ == "__main__":
    key = jax.random.PRNGKey(0)
    x = jax.random.normal(key, (2, 3, 16, 16), jnp.float32)

    lanes_img0 = [
        np.array([[0.20, 0.05], [0.35, 0.50], [0.55, 0.95]], np.float32),
        np.array([[0.80, 0.05], [0.65, 0.50], [0.45, 0.95]], np.float32),
    ]
    lanes_img1 = [
        np.array([[0.10, 0.10], [0.30, 0.90]], np.float32),
    ]
    targets = {'lane': [lanes_img0, lanes_img1]}

    model = LaneNetPallas(input_size=(16, 16), embedding_channels=EMBED_CH)
    loss = model.forward(x, targets)
    loss = jax.tree_util.tree_map(jax.block_until_ready, loss)
    for v in jax.tree_util.tree_leaves(loss):
        assert np.all(np.isfinite(np.asarray(v)))
    print("KERNEL_OK")
</pallas_src>

<mosaic_0001>
module attributes {stable_mosaic.version = 11 : i64} {
  func.func @_backbone_kernel(%arg0: i32, %arg1: i32, %arg2: memref<1x18x18x3xf32, #tpu.memory_space<vmem>>, %arg3: memref<27x32xbf16, #tpu.memory_space<vmem>>, %arg4: memref<1x32xf32, #tpu.memory_space<vmem>>, %arg5: memref<16x32xbf16, #tpu.memory_space<vmem>>, %arg6: memref<16x1xf32, #tpu.memory_space<vmem>>, %arg7: memref<1x16x256xf32, #tpu.memory_space<vmem>>) attributes {dimension_semantics = [#tpu.dimension_semantics<parallel>, #tpu.dimension_semantics<parallel>], iteration_bounds = array<i64: 2, 1>, scalar_prefetch = 0 : i64, scratch_operands = 0 : i64, tpu.core_type = #tpu.core_type<tc>, window_params = [{transform_indices = @transform_0, window_bounds = array<i64: 1, 18, 18, 3>}, {pipeline_mode = #tpu.pipeline_mode<synchronous>, transform_indices = @transform_1, window_bounds = array<i64: 27, 32>}, {pipeline_mode = #tpu.pipeline_mode<synchronous>, transform_indices = @transform_2, window_bounds = array<i64: 1, 32>}, {pipeline_mode = #tpu.pipeline_mode<synchronous>, transform_indices = @transform_3, window_bounds = array<i64: 16, 32>}, {pipeline_mode = #tpu.pipeline_mode<synchronous>, transform_indices = @transform_4, window_bounds = array<i64: 16, 1>}, {transform_indices = @transform_5, window_bounds = array<i64: 1, 16, 256>}]} {
    %c16_i32 = arith.constant 16 : i32
    %0 = arith.muli %arg1, %c16_i32 : i32
    %1 = tpu.assume_multiple %0, 16 : i32
    %c0_i32 = arith.constant 0 : i32
    %2 = arith.addi %1, %c0_i32 : i32
    %c0 = arith.constant 0 : index
    %3 = arith.index_cast %2 : i32 to index
    %c0_0 = arith.constant 0 : index
    %c0_1 = arith.constant 0 : index
    %4 = vector.load %arg2[%c0, %3, %c0_0, %c0_1] : memref<1x18x18x3xf32, #tpu.memory_space<vmem>>, vector<1x16x16x3xf32>
    %5 = vector.shape_cast %4 : vector<1x16x16x3xf32> to vector<16x16x3xf32>
    %6 = vector.shape_cast %5 : vector<16x16x3xf32> to vector<256x3xf32>
    %c0_i32_2 = arith.constant 0 : i32
    %7 = arith.addi %1, %c0_i32_2 : i32
    %c0_3 = arith.constant 0 : index
    %8 = arith.index_cast %7 : i32 to index
    %c1 = arith.constant 1 : index
    %c0_4 = arith.constant 0 : index
    %9 = vector.load %arg2[%c0_3, %8, %c1, %c0_4] : memref<1x18x18x3xf32, #tpu.memory_space<vmem>>, vector<1x16x16x3xf32>
    %10 = vector.shape_cast %9 : vector<1x16x16x3xf32> to vector<16x16x3xf32>
    %11 = vector.shape_cast %10 : vector<16x16x3xf32> to vector<256x3xf32>
    %c0_i32_5 = arith.constant 0 : i32
    %12 = arith.addi %1, %c0_i32_5 : i32
    %c0_6 = arith.constant 0 : index
    %13 = arith.index_cast %12 : i32 to index
    %c2 = arith.constant 2 : index
    %c0_7 = arith.constant 0 : index
    %14 = vector.load %arg2[%c0_6, %13, %c2, %c0_7] : memref<1x18x18x3xf32, #tpu.memory_space<vmem>>, vector<1x16x16x3xf32>
    %15 = vector.shape_cast %14 : vector<1x16x16x3xf32> to vector<16x16x3xf32>
    %16 = vector.shape_cast %15 : vector<16x16x3xf32> to vector<256x3xf32>
    %c1_i32 = arith.constant 1 : i32
    %17 = arith.addi %1, %c1_i32 : i32
    %c0_8 = arith.constant 0 : index
    %18 = arith.index_cast %17 : i32 to index
    %c0_9 = arith.constant 0 : index
    %c0_10 = arith.constant 0 : index
    %19 = vector.load %arg2[%c0_8, %18, %c0_9, %c0_10] : memref<1x18x18x3xf32, #tpu.memory_space<vmem>>, vector<1x16x16x3xf32>
    %20 = vector.shape_cast %19 : vector<1x16x16x3xf32> to vector<16x16x3xf32>
    %21 = vector.shape_cast %20 : vector<16x16x3xf32> to vector<256x3xf32>
    %c1_i32_11 = arith.constant 1 : i32
    %22 = arith.addi %1, %c1_i32_11 : i32
    %c0_12 = arith.constant 0 : index
    %23 = arith.index_cast %22 : i32 to index
    %c1_13 = arith.constant 1 : index
    %c0_14 = arith.constant 0 : index
    %24 = vector.load %arg2[%c0_12, %23, %c1_13, %c0_14] : memref<1x18x18x3xf32, #tpu.memory_space<vmem>>, vector<1x16x16x3xf32>
    %25 = vector.shape_cast %24 : vector<1x16x16x3xf32> to vector<16x16x3xf32>
    %26 = vector.shape_cast %25 : vector<16x16x3xf32> to vector<256x3xf32>
    %c1_i32_15 = arith.constant 1 : i32
    %27 = arith.addi %1, %c1_i32_15 : i32
    %c0_16 = arith.constant 0 : index
    %28 = arith.index_cast %27 : i32 to index
    %c2_17 = arith.constant 2 : index
    %c0_18 = arith.constant 0 : index
    %29 = vector.load %arg2[%c0_16, %28, %c2_17, %c0_18] : memref<1x18x18x3xf32, #tpu.memory_space<vmem>>, vector<1x16x16x3xf32>
    %30 = vector.shape_cast %29 : vector<1x16x16x3xf32> to vector<16x16x3xf32>
    %31 = vector.shape_cast %30 : vector<16x16x3xf32> to vector<256x3xf32>
    %c2_i32 = arith.constant 2 : i32
    %32 = arith.addi %1, %c2_i32 : i32
    %c0_19 = arith.constant 0 : index
    %33 = arith.index_cast %32 : i32 to index
    %c0_20 = arith.constant 0 : index
    %c0_21 = arith.constant 0 : index
    %34 = vector.load %arg2[%c0_19, %33, %c0_20, %c0_21] : memref<1x18x18x3xf32, #tpu.memory_space<vmem>>, vector<1x16x16x3xf32>
    %35 = vector.shape_cast %34 : vector<1x16x16x3xf32> to vector<16x16x3xf32>
    %36 = vector.shape_cast %35 : vector<16x16x3xf32> to vector<256x3xf32>
    %c2_i32_22 = arith.constant 2 : i32
    %37 = arith.addi %1, %c2_i32_22 : i32
    %c0_23 = arith.constant 0 : index
    %38 = arith.index_cast %37 : i32 to index
    %c1_24 = arith.constant 1 : index
    %c0_25 = arith.constant 0 : index
    %39 = vector.load %arg2[%c0_23, %38, %c1_24, %c0_25] : memref<1x18x18x3xf32, #tpu.memory_space<vmem>>, vector<1x16x16x3xf32>
    %40 = vector.shape_cast %39 : vector<1x16x16x3xf32> to vector<16x16x3xf32>
    %41 = vector.shape_cast %40 : vector<16x16x3xf32> to vector<256x3xf32>
    %c2_i32_26 = arith.constant 2 : i32
    %42 = arith.addi %1, %c2_i32_26 : i32
    %c0_27 = arith.constant 0 : index
    %43 = arith.index_cast %42 : i32 to index
    %c2_28 = arith.constant 2 : index
    %c0_29 = arith.constant 0 : index
    %44 = vector.load %arg2[%c0_27, %43, %c2_28, %c0_29] : memref<1x18x18x3xf32, #tpu.memory_space<vmem>>, vector<1x16x16x3xf32>
    %45 = vector.shape_cast %44 : vector<1x16x16x3xf32> to vector<16x16x3xf32>
    %46 = vector.shape_cast %45 : vector<16x16x3xf32> to vector<256x3xf32>
    %47 = tpu.concatenate %6, %11, %16, %21, %26, %31, %36, %41, %46 in 1 : vector<256x3xf32>, vector<256x3xf32>, vector<256x3xf32>, vector<256x3xf32>, vector<256x3xf32>, vector<256x3xf32>, vector<256x3xf32>, vector<256x3xf32>, vector<256x3xf32> -> vector<256x27xf32>
    %48 = arith.truncf %47 : vector<256x27xf32> to vector<256x27xbf16>
    %c0_30 = arith.constant 0 : index
    %c0_31 = arith.constant 0 : index
    %49 = vector.load %arg3[%c0_30, %c0_31] : memref<27x32xbf16, #tpu.memory_space<vmem>>, vector<27x32xbf16>
    %cst = arith.constant dense<0.000000e+00> : vector<256x32xf32>
    %50 = tpu.matmul %48, %49, %cst {dimension_numbers = #tpu.dot_dimension_numbers<[1], [0], [0], [1], [0, 0, 1, 1], [], []>} : vector<256x27xbf16>, vector<27x32xbf16>, vector<256x32xf32> -> vector<256x32xf32>
    %c0_32 = arith.constant 0 : index
    %c0_33 = arith.constant 0 : index
    %51 = vector.load %arg4[%c0_32, %c0_33] : memref<1x32xf32, #tpu.memory_space<vmem>>, vector<1x32xf32>
    %52 = vector.broadcast %51 : vector<1x32xf32> to vector<256x32xf32>
    %53 = arith.addf %50, %52 : vector<256x32xf32>
    %cst_34 = arith.constant 0.000000e+00 : f32
    %54 = vector.broadcast %cst_34 : f32 to vector<256x32xf32>
    %55 = arith.maximumf %53, %54 : vector<256x32xf32>
    %56 = arith.truncf %55 : vector<256x32xf32> to vector<256x32xbf16>
    %c0_35 = arith.constant 0 : index
    %c0_36 = arith.constant 0 : index
    %57 = vector.load %arg5[%c0_35, %c0_36] : memref<16x32xbf16, #tpu.memory_space<vmem>>, vector<16x32xbf16>
    %cst_37 = arith.constant dense<0.000000e+00> : vector<16x256xf32>
    %58 = tpu.matmul %57, %56, %cst_37 {dimension_numbers = #tpu.dot_dimension_numbers<[1], [1], [0], [0], [0, 0, 1, 0], [], []>} : vector<16x32xbf16>, vector<256x32xbf16>, vector<16x256xf32> -> vector<16x256xf32>
    %c0_38 = arith.constant 0 : index
    %c0_39 = arith.constant 0 : index
    %59 = vector.load %arg6[%c0_38, %c0_39] : memref<16x1xf32, #tpu.memory_space<vmem>>, vector<16x1xf32>
    %60 = vector.broadcast %59 : vector<16x1xf32> to vector<16x256xf32>
    %61 = arith.addf %58, %60 : vector<16x256xf32>
    %c0_40 = arith.constant 0 : index
    %c0_41 = arith.constant 0 : index
    %c0_42 = arith.constant 0 : index
    %62 = vector.load %arg7[%c0_40, %c0_41, %c0_42] : memref<1x16x256xf32, #tpu.memory_space<vmem>>, vector<1x16x256xf32>
    %63 = vector.shape_cast %62 : vector<1x16x256xf32> to vector<16x256xf32>
    %64 = vector.shape_cast %61 : vector<16x256xf32> to vector<1x16x256xf32>
    tpu.vector_store %arg7[%c0_40, %c0_41, %c0_42], %64 {strides = array<i32>} : memref<1x16x256xf32, #tpu.memory_space<vmem>>, vector<1x16x256xf32>,
    return
  }
  func.func @transform_0(%arg0: i32, %arg1: i32) -> (i32, i32, i32, i32) {
    %c0_i32 = arith.constant 0 : i32
    %c0_i32_0 = arith.constant 0 : i32
    %c0_i32_1 = arith.constant 0 : i32
    %c0_i32_2 = arith.constant 0 : i32
    return %arg0, %c0_i32, %c0_i32_0, %c0_i32_1 : i32, i32, i32, i32
  }
  func.func @transform_1(%arg0: i32, %arg1: i32) -> (i32, i32) {
    %c0_i32 = arith.constant 0 : i32
    %c0_i32_0 = arith.constant 0 : i32
    %c0_i32_1 = arith.constant 0 : i32
    return %c0_i32, %c0_i32_0 : i32, i32
  }
  func.func @transform_2(%arg0: i32, %arg1: i32) -> (i32, i32) {
    %c0_i32 = arith.constant 0 : i32
    %c0_i32_0 = arith.constant 0 : i32
    %c0_i32_1 = arith.constant 0 : i32
    return %c0_i32, %c0_i32_0 : i32, i32
  }
  func.func @transform_3(%arg0: i32, %arg1: i32) -> (i32, i32) {
    %c0_i32 = arith.constant 0 : i32
    %c0_i32_0 = arith.constant 0 : i32
    %c0_i32_1 = arith.constant 0 : i32
    return %c0_i32, %c0_i32_0 : i32, i32
  }
  func.func @transform_4(%arg0: i32, %arg1: i32) -> (i32, i32) {
    %c0_i32 = arith.constant 0 : i32
    %c0_i32_0 = arith.constant 0 : i32
    %c0_i32_1 = arith.constant 0 : i32
    return %c0_i32, %c0_i32_0 : i32, i32
  }
  func.func @transform_5(%arg0: i32, %arg1: i32) -> (i32, i32, i32) {
    %c0_i32 = arith.constant 0 : i32
    %c0_i32_0 = arith.constant 0 : i32
    return %arg0, %c0_i32, %arg1 : i32, i32, i32
  }
}

</mosaic_0001>

<llo_original>
// kernel: tpu_custom_call.1
$region0: #{tpu_custom_call.1}
  #allocation0 [shape = 'u32[]', space=smem, size = 0x4, offset = 0x4, fixed_abs, tag = 'smem constant byte address 0x4 - core index']
  #allocation1 [shape = 'u32[72,128]{1,0:T(1,128)}', space=vmem, size = 0x9000, scoped, tag = 'internal scratch']
  %s0 = inlined_call_operand.vmem [shape: f32[2,18,18,3], index: 0, kind: input, shape index: {}]
  %s1 = inlined_call_operand.vmem [shape: bf16[27,32], index: 1, kind: input, shape index: {}]
  %s2 = inlined_call_operand.vmem [shape: f32[1,32], index: 2, kind: input, shape index: {}]
  %s3 = inlined_call_operand.vmem [shape: bf16[16,32], index: 3, kind: input, shape index: {}]
  %s4 = inlined_call_operand.vmem [shape: f32[16,1], index: 4, kind: input, shape index: {}]
  %s5 = inlined_call_operand.hbm [shape: f32[2,16,256], index: 5, kind: output, shape index: {}]
  %s6 = sld [smem:[#allocation0]]
  $region53: #{tpu_custom_call.1} parent=0
    _
  %s8 = ssub.s32 1, %s6
  %s9 = scalar_select 0, %s8, %s6
  $region1: #{tpu_custom_call.1} parent=0
    #allocation2 [shape = 'u8[32768]{0}', space=vmem, size = 0x8000, scoped, tag = 'output window, operand 0']
    #allocation3 [shape = 's32[2]{0}', space=sflag, size = 0x8, scoped, tag = 'scoped memory for tpu_custom_call.1']
    %10 = vsyncpa [#allocation3], 0
    %s11 = scalar_lea.sflag [#allocation3], 1
    %12 = vsyncpa %s11, 0
    loop: start=0, step=1, limit=4
    $region2: #{tpu_custom_call.1} parent=1 // loop_pre_header
      _
    $region3: #{tpu_custom_call.1} parent=1 // loop_header
      %s14 = sphi 0, %s18
      %p15 = scmp.ge.s32.totalorder %s14, 4
      %s21 = sphi 0, %s33
      %s22 = sphi 0, %s29
      %s23 = sphi 0, %s21
      %s24 = sphi 0, %s22
      %s25 = sphi 0, %s23
      %s26 = sphi 0, %s24
      %s36 = sphi 0, %s38
      %s39 = sphi 0, %s36
      %s40 = sphi 0, %s39
      %s56 = sphi 0, %s40
      %s60 = sphi 0, %s60
      %s62 = sphi 0, %s60
      %s63 = sphi 0, %s62
      %s77 = sphi 0, %s63
      %s81 = sphi 0, %s81
      %s83 = sphi 0, %s81
      %s84 = sphi 0, %s83
      %s98 = sphi 0, %s84
      %s102 = sphi 0, %s102
      %s104 = sphi 0, %s102
      %s105 = sphi 0, %s104
      %s119 = sphi 0, %s105
      %s123 = sphi 0, %s123
      %s125 = sphi 0, %s123
      %s126 = sphi 0, %s125
      %s140 = sphi 0, %s126
      %s148 = sphi 0, %s150
      %s151 = sphi 0, %s148
      %s152 = sphi 0, %s151
      %s168 = sphi 0, %s152
    $region4: #{tpu_custom_call.1} parent=1 // loop_header_branch
      %17 = sbr.rel (%p15) target = $region8
    $region5: #{tpu_custom_call.1} parent=1 // loop_body
      %s19 = ssub.s32 %s14, 1
      %s20 = ssub.s32 %s14, 2
      %s27 = sadd.s32 1, %s22
      %p28 = scmp.ge.s32.totalorder %s27, 1
      %s29 = scalar_select %p28, 0, %s27
      %s30 = sadd.s32 1, %s21
      %s31 = scalar_select %p28, %s30, %s21
      %p32 = scmp.ge.s32.totalorder %s31, 2
      %s33 = scalar_select %p32, 0, %s31
      %s34 = ssub.s32 %s21, %s33
      %p35 = scmp.eq.s32.totalorder %s34, 0
      %s37 = sadd.s32 %s36, 1
      %s38 = scalar_select %p35, %s36, %s37
      %p41 = pneg %p35
      %p42 = scmp.eq.s32.totalorder %s14, 1
      %p43 = por %p41, %p42
      %p44 = scmp.ne.s32.totalorder %s36, %s39
      %p45 = scmp.eq.s32.totalorder %s14, 0
      %p46 = por %p44, %p45
      %p47 = scmp.ne.s32.totalorder %s36, %s39
      %p48 = scmp.eq.s32.totalorder %s19, 1
      %p49 = por %p47, %p48
      %p50 = scmp.ne.s32.totalorder %s39, %s40
      %p51 = scmp.eq.s32.totalorder %s19, 0
      %p52 = por %p50, %p51
      %p53 = scmp.ne.s32.totalorder %s39, %s40
      %p54 = scmp.eq.s32.totalorder %s20, 1
      %p55 = por %p53, %p54
      %p57 = scmp.ne.s32.totalorder %s40, %s56
      %p58 = scmp.eq.s32.totalorder %s20, 0
      %p59 = por %p57, %p58
      %s61 = sadd.s32 %s60, 1
      %p64 = scmp.eq.s32.totalorder %s14, 1
      %p65 = scmp.ne.s32.totalorder %s60, %s62
      %p66 = scmp.eq.s32.totalorder %s14, 0
      %p67 = por %p65, %p66
      %p68 = scmp.ne.s32.totalorder %s60, %s62
      %p69 = scmp.eq.s32.totalorder %s19, 1
      %p70 = por %p68, %p69
      %p71 = scmp.ne.s32.totalorder %s62, %s63
      %p72 = scmp.eq.s32.totalorder %s19, 0
      %p73 = por %p71, %p72
      %p74 = scmp.ne.s32.totalorder %s62, %s63
      %p75 = scmp.eq.s32.totalorder %s20, 1
      %p76 = por %p74, %p75
      %p78 = scmp.ne.s32.totalorder %s63, %s77
      %p79 = scmp.eq.s32.totalorder %s20, 0
      %p80 = por %p78, %p79
      %s82 = sadd.s32 %s81, 1
      %p85 = scmp.eq.s32.totalorder %s14, 1
      %p86 = scmp.ne.s32.totalorder %s81, %s83
      %p87 = scmp.eq.s32.totalorder %s14, 0
      %p88 = por %p86, %p87
      %p89 = scmp.ne.s32.totalorder %s81, %s83
      %p90 = scmp.eq.s32.totalorder %s19, 1
      %p91 = por %p89, %p90
      %p92 = scmp.ne.s32.totalorder %s83, %s84
      %p93 = scmp.eq.s32.totalorder %s19, 0
      %p94 = por %p92, %p93
      %p95 = scmp.ne.s32.totalorder %s83, %s84
      %p96 = scmp.eq.s32.totalorder %s20, 1
      %p97 = por %p95, %p96
      %p99 = scmp.ne.s32.totalorder %s84, %s98
      %p100 = scmp.eq.s32.totalorder %s20, 0
      %p101 = por %p99, %p100
      %s103 = sadd.s32 %s102, 1
      %p106 = scmp.eq.s32.totalorder %s14, 1
      %p107 = scmp.ne.s32.totalorder %s102, %s104
      %p108 = scmp.eq.s32.totalorder %s14, 0
      %p109 = por %p107, %p108
      %p110 = scmp.ne.s32.totalorder %s102, %s104
      %p111 = scmp.eq.s32.totalorder %s19, 1
      %p112 = por %p110, %p111
      %p113 = scmp.ne.s32.totalorder %s104, %s105
      %p114 = scmp.eq.s32.totalorder %s19, 0
      %p115 = por %p113, %p114
      %p116 = scmp.ne.s32.totalorder %s104, %s105
      %p117 = scmp.eq.s32.totalorder %s20, 1
      %p118 = por %p116, %p117
      %p120 = scmp.ne.s32.totalorder %s105, %s119
      %p121 = scmp.eq.s32.totalorder %s20, 0
      %p122 = por %p120, %p121
      %s124 = sadd.s32 %s123, 1
      %p127 = scmp.eq.s32.totalorder %s14, 1
      %p128 = scmp.ne.s32.totalorder %s123, %s125
      %p129 = scmp.eq.s32.totalorder %s14, 0
      %p130 = por %p128, %p129
      %p131 = scmp.ne.s32.totalorder %s123, %s125
      %p132 = scmp.eq.s32.totalorder %s19, 1
      %p133 = por %p131, %p132
      %p134 = scmp.ne.s32.totalorder %s125, %s126
      %p135 = scmp.eq.s32.totalorder %s19, 0
      %p136 = por %p134, %p135
      %p137 = scmp.ne.s32.totalorder %s125, %s126
      %p138 = scmp.eq.s32.totalorder %s20, 1
      %p139 = por %p137, %p138
      %p141 = scmp.ne.s32.totalorder %s126, %s140
      %p142 = scmp.eq.s32.totalorder %s20, 0
      %p143 = por %p141, %p142
      %s144 = ssub.s32 %s21, %s33
      %s145 = ssub.s32 %s22, %s29
      %s146 = sor.u32 %s144, %s145
      %p147 = scmp.eq.s32.totalorder %s146, 0
      %s149 = sadd.s32 %s148, 1
      %s150 = scalar_select %p147, %s148, %s149
      %p153 = pneg %p147
      %p154 = scmp.eq.s32.totalorder %s14, 1
      %p155 = por %p153, %p154
      %p156 = scmp.ne.s32.totalorder %s148, %s151
      %p157 = scmp.eq.s32.totalorder %s14, 0
      %p158 = por %p156, %p157
      %p159 = scmp.ne.s32.totalorder %s148, %s151
      %p160 = scmp.eq.s32.totalorder %s19, 1
      %p161 = por %p159, %p160
      %p162 = scmp.ne.s32.totalorder %s151, %s152
      %p163 = scmp.eq.s32.totalorder %s19, 0
      %p164 = por %p162, %p163
      %p165 = scmp.ne.s32.totalorder %s151, %s152
      %p166 = scmp.eq.s32.totalorder %s20, 1
      %p167 = por %p165, %p166
      %p169 = scmp.ne.s32.totalorder %s152, %s168
      %p170 = scmp.eq.s32.totalorder %s20, 0
      %p171 = por %p169, %p170
      %p172 = scmp.le.s32.totalorder 1, %s14
      %p173 = scmp.lt.s32.totalorder %s14, 3
      %p174 = pnand %p172, %p173
      %p175 = pneg %p174
      // Predicated region
      $region9: #{tpu_custom_call.1} parent=5 // pred_check
        _
      $region10: #{tpu_custom_call.1} parent=5 // pred_check_branch
        %177 = sbr.rel (%p174) target = $region12
      $region11: #{tpu_custom_call.1} parent=5 // pred_region
        %s178 = ssub.s32 %s14, 1
        // Predicated region
        $region13: #{tpu_custom_call.1} parent=11 // pred_check
          %p179 = pneg %p73
        $region14: #{tpu_custom_call.1} parent=11 // pred_check_branch
          %181 = sbr.rel (%p179) target = $region16
        $region15: #{tpu_custom_call.1} parent=11 // pred_region
          _
        $region16: #{tpu_custom_call.1} parent=11 // pred_fallthru
          _
        // Predicated region
        $region17: #{tpu_custom_call.1} parent=11 // pred_check
          %p182 = pneg %p94
        $region18: #{tpu_custom_call.1} parent=11 // pred_check_branch
          %184 = sbr.rel (%p182) target = $region20
        $region19: #{tpu_custom_call.1} parent=11 // pred_region
          _
        $region20: #{tpu_custom_call.1} parent=11 // pred_fallthru
          _
        // Predicated region
        $region21: #{tpu_custom_call.1} parent=11 // pred_check
          %p185 = pneg %p115
        $region22: #{tpu_custom_call.1} parent=11 // pred_check_branch
          %187 = sbr.rel (%p185) target = $region24
        $region23: #{tpu_custom_call.1} parent=11 // pred_region
          _
        $region24: #{tpu_custom_call.1} parent=11 // pred_fallthru
          _
        // Predicated region
        $region25: #{tpu_custom_call.1} parent=11 // pred_check
          %p188 = pneg %p136
        $region26: #{tpu_custom_call.1} parent=11 // pred_check_branch
          %190 = sbr.rel (%p188) target = $region28
        $region27: #{tpu_custom_call.1} parent=11 // pred_region
          _
        $region28: #{tpu_custom_call.1} parent=11 // pred_fallthru
          _
      $region12: #{tpu_custom_call.1} parent=5 // pred_fallthru
        _
      %p191 = scmp.lt.s32.totalorder %s14, 2
      // Predicated region
      $region29: #{tpu_custom_call.1} parent=5 // pred_check
        %p192 = pneg %p191
      $region30: #{tpu_custom_call.1} parent=5 // pred_check_branch
        %194 = sbr.rel (%p192) target = $region32
      $region31: #{tpu_custom_call.1} parent=5 // pred_region
        // Predicated region
        $region33: #{tpu_custom_call.1} parent=31 // pred_check
          %p195 = pneg %p46
        $region34: #{tpu_custom_call.1} parent=31 // pred_check_branch
          %197 = sbr.rel (%p195) target = $region36
        $region35: #{tpu_custom_call.1} parent=31 // pred_region
          %p198 = scmp.lt.s32.totalorder %s21, 1
          %s199 = scalar_select %p198, %s21, 1
          %s200 = smul.addr %s199, 54
          %s201 = smul.addr %s200, 8
          %s202 = scalar_lea.vmem %s0, %s201
        $region36: #{tpu_custom_call.1} parent=31 // pred_fallthru
          _
      $region32: #{tpu_custom_call.1} parent=5 // pred_fallthru
        _
      %p203 = scmp.le.s32.totalorder 1, %s14
      %p204 = scmp.lt.s32.totalorder %s14, 3
      %p205 = pnand %p203, %p204
      %p206 = pneg %p205
      // Predicated region
      $region37: #{tpu_custom_call.1} parent=5 // pred_check
        _
      $region38: #{tpu_custom_call.1} parent=5 // pred_check_branch
        %208 = sbr.rel (%p205) target = $region40
      $region39: #{tpu_custom_call.1} parent=5 // pred_region
        %s209 = ssub.s32 %s14, 1
        %p210 = scmp.lt.s32.totalorder %s23, 1
        %s211 = scalar_select %p210, %s23, 1
        %s212 = smul.addr %s211, 54
        %s213 = smul.addr %s212, 8
        %s214 = scalar_lea.vmem %s0, %s213
        %p215 = pneg %p52
        %p216 = pneg %p49
        %p217 = pneg %p73
        %p218 = pneg %p70
        %p219 = pneg %p94
        %p220 = pneg %p91
        %p221 = pneg %p115
        %p222 = pneg %p112
        %p223 = pneg %p136
        %p224 = pneg %p133
        %p225 = pneg %p164
        %p226 = pneg %p161
        %s227 = sand.u32 %s151, 1
        %s228 = scalar_lea.sflag [#allocation3], %s227
        %s229 = sand.u32 %s151, 1
        %s230 = smul.addr %s229, 32
        %s231 = scalar_lea.vmem [#allocation2], %s230
        %p232 = scmp.lt.s32.totalorder %s23, 1
        %s233 = scalar_select %p232, %s23, 1
        %s234 = smul.addr %s233, 54
        %s235 = smul.addr %s234, 8
        %s236 = scalar_lea.vmem %s0, %s235
        %s237 = smul.u32 2, %s24
        %s239 = smul.u32 %s24, 16
        %s240 = smul.u32 %s239, 24
        %s241 = scalar_lea.vmem %s236, %s240
        %v242 = vld [vmem:[%s241] sm:$0xff]
        %v243 = vld [vmem:[%s241 + $0x8] sm:$0xff]
        %v244 = vld [vmem:[%s241 + $0x18] sm:$0xff]
        %v245 = vld [vmem:[%s241 + $0x20] sm:$0xff]
        %v246 = vld [vmem:[%s241 + $0x30] sm:$0xff]
        %v247 = vld [vmem:[%s241 + $0x38] sm:$0xff]
        %v248 = vld [vmem:[%s241 + $0x48] sm:$0xff]
        %v249 = vld [vmem:[%s241 + $0x50] sm:$0xff]
        %v250 = vld [vmem:[%s241 + $0x60] sm:$0xff]
        %v251 = vld [vmem:[%s241 + $0x68] sm:$0xff]
        %v252 = vld [vmem:[%s241 + $0x78] sm:$0xff]
        %v253 = vld [vmem:[%s241 + $0x80] sm:$0xff]
        %v254 = vld [vmem:[%s241 + $0x90] sm:$0xff]
        %v255 = vld [vmem:[%s241 + $0x98] sm:$0xff]
        %v256 = vld [vmem:[%s241 + $0xa8] sm:$0xff]
        %v257 = vld [vmem:[%s241 + $0xb0] sm:$0xff]
        %v258 = vld [vmem:[%s241 + $0xc0] sm:$0xff]
        %v259 = vld [vmem:[%s241 + $0xc8] sm:$0xff]
        %v260 = vld [vmem:[%s241 + $0xd8] sm:$0xff]
        %v261 = vld [vmem:[%s241 + $0xe0] sm:$0xff]
        %v262 = vld [vmem:[%s241 + $0xf0] sm:$0xff]
        %v263 = vld [vmem:[%s241 + $0xf8] sm:$0xff]
        %v264 = vld [vmem:[%s241 + $0x108] sm:$0xff]
        %v265 = vld [vmem:[%s241 + $0x110] sm:$0xff]
        %v266 = vld [vmem:[%s241 + $0x120] sm:$0xff]
        %v267 = vld [vmem:[%s241 + $0x128] sm:$0xff]
        %v268 = vld [vmem:[%s241 + $0x138] sm:$0xff]
        %v269 = vld [vmem:[%s241 + $0x140] sm:$0xff]
        %v270 = vld [vmem:[%s241 + $0x150] sm:$0xff]
        %v271 = vld [vmem:[%s241 + $0x158] sm:$0xff]
        %v272 = vld [vmem:[%s241 + $0x168] sm:$0xff]
        %v273 = vld [vmem:[%s241 + $0x170] sm:$0xff]
        %v274 = vld [vmem:[%s241 + $0x1] sm:$0xff]
        %v275 = vld [vmem:[%s241 + $0x9] sm:$0xff]
        %v276 = vld [vmem:[%s241 + $0x19] sm:$0xff]
        %v277 = vld [vmem:[%s241 + $0x21] sm:$0xff]
        %v278 = vld [vmem:[%s241 + $0x31] sm:$0xff]
        %v279 = vld [vmem:[%s241 + $0x39] sm:$0xff]
        %v280 = vld [vmem:[%s241 + $0x49] sm:$0xff]
        %v281 = vld [vmem:[%s241 + $0x51] sm:$0xff]
        %v282 = vld [vmem:[%s241 + $0x61] sm:$0xff]
        %v283 = vld [vmem:[%s241 + $0x69] sm:$0xff]
        %v284 = vld [vmem:[%s241 + $0x79] sm:$0xff]
        %v285 = vld [vmem:[%s241 + $0x81] sm:$0xff]
        %v286 = vld [vmem:[%s241 + $0x91] sm:$0xff]
        %v287 = vld [vmem:[%s241 + $0x99] sm:$0xff]
        %v288 = vld [vmem:[%s241 + $0xa9] sm:$0xff]
        %v289 = vld [vmem:[%s241 + $0xb1] sm:$0xff]
        %v290 = vld [vmem:[%s241 + $0xc1] sm:$0xff]
        %v291 = vld [vmem:[%s241 + $0xc9] sm:$0xff]
        %v292 = vld [vmem:[%s241 + $0xd9] sm:$0xff]
        %v293 = vld [vmem:[%s241 + $0xe1] sm:$0xff]
        %v294 = vld [vmem:[%s241 + $0xf1] sm:$0xff]
        %v295 = vld [vmem:[%s241 + $0xf9] sm:$0xff]
        %v296 = vld [vmem:[%s241 + $0x109] sm:$0xff]
        %v297 = vld [vmem:[%s241 + $0x111] sm:$0xff]
        %v298 = vld [vmem:[%s241 + $0x121] sm:$0xff]
        %v299 = vld [vmem:[%s241 + $0x129] sm:$0xff]
        %v300 = vld [vmem:[%s241 + $0x139] sm:$0xff]
        %v301 = vld [vmem:[%s241 + $0x141] sm:$0xff]
        %v302 = vld [vmem:[%s241 + $0x151] sm:$0xff]
        %v303 = vld [vmem:[%s241 + $0x159] sm:$0xff]
        %v304 = vld [vmem:[%s241 + $0x169] sm:$0xff]
        %v305 = vld [vmem:[%s241 + $0x171] sm:$0xff]
        %v306 = vld [vmem:[%s241 + $0x2] sm:$0xff]
        %v307 = vld [vmem:[%s241 + $0xa] sm:$0xff]
        %v308 = vld [vmem:[%s241 + $0x1a] sm:$0xff]
        %v309 = vld [vmem:[%s241 + $0x22] sm:$0xff]
        %v310 = vld [vmem:[%s241 + $0x32] sm:$0xff]
        %v311 = vld [vmem:[%s241 + $0x3a] sm:$0xff]
        %v312 = vld [vmem:[%s241 + $0x4a] sm:$0xff]
        %v313 = vld [vmem:[%s241 + $0x52] sm:$0xff]
        %v314 = vld [vmem:[%s241 + $0x62] sm:$0xff]
        %v315 = vld [vmem:[%s241 + $0x6a] sm:$0xff]
        %v316 = vld [vmem:[%s241 + $0x7a] sm:$0xff]
        %v317 = vld [vmem:[%s241 + $0x82] sm:$0xff]
        %v318 = vld [vmem:[%s241 + $0x92] sm:$0xff]
        %v319 = vld [vmem:[%s241 + $0x9a] sm:$0xff]
        %v320 = vld [vmem:[%s241 + $0xaa] sm:$0xff]
        %v321 = vld [vmem:[%s241 + $0xb2] sm:$0xff]
        %v322 = vld [vmem:[%s241 + $0xc2] sm:$0xff]
        %v323 = vld [vmem:[%s241 + $0xca] sm:$0xff]
        %v324 = vld [vmem:[%s241 + $0xda] sm:$0xff]
        %v325 = vld [vmem:[%s241 + $0xe2] sm:$0xff]
        %v326 = vld [vmem:[%s241 + $0xf2] sm:$0xff]
        %v327 = vld [vmem:[%s241 + $0xfa] sm:$0xff]
        %v328 = vld [vmem:[%s241 + $0x10a] sm:$0xff]
        %v329 = vld [vmem:[%s241 + $0x112] sm:$0xff]
        %v330 = vld [vmem:[%s241 + $0x122] sm:$0xff]
        %v331 = vld [vmem:[%s241 + $0x12a] sm:$0xff]
        %v332 = vld [vmem:[%s241 + $0x13a] sm:$0xff]
        %v333 = vld [vmem:[%s241 + $0x142] sm:$0xff]
        %v334 = vld [vmem:[%s241 + $0x152] sm:$0xff]
        %v335 = vld [vmem:[%s241 + $0x15a] sm:$0xff]
        %v336 = vld [vmem:[%s241 + $0x16a] sm:$0xff]
        %v337 = vld [vmem:[%s241 + $0x172] sm:$0xff]
        %s338 = sadd.s32 %s239, 1
        %s339 = smul.u32 %s338, 24
        %s340 = scalar_lea.vmem %s236, %s339
        %v341 = vld [vmem:[%s340] sm:$0xff]
        %v342 = vld [vmem:[%s340 + $0x8] sm:$0xff]
        %v343 = vld [vmem:[%s340 + $0x18] sm:$0xff]
        %v344 = vld [vmem:[%s340 + $0x20] sm:$0xff]
        %v345 = vld [vmem:[%s340 + $0x30] sm:$0xff]
        %v346 = vld [vmem:[%s340 + $0x38] sm:$0xff]
        %v347 = vld [vmem:[%s340 + $0x48] sm:$0xff]
        %v348 = vld [vmem:[%s340 + $0x50] sm:$0xff]
        %v349 = vld [vmem:[%s340 + $0x60] sm:$0xff]
        %v350 = vld [vmem:[%s340 + $0x68] sm:$0xff]
        %v351 = vld [vmem:[%s340 + $0x78] sm:$0xff]
        %v352 = vld [vmem:[%s340 + $0x80] sm:$0xff]
        %v353 = vld [vmem:[%s340 + $0x90] sm:$0xff]
        %v354 = vld [vmem:[%s340 + $0x98] sm:$0xff]
        %v355 = vld [vmem:[%s340 + $0xa8] sm:$0xff]
        %v356 = vld [vmem:[%s340 + $0xb0] sm:$0xff]
        %v357 = vld [vmem:[%s340 + $0xc0] sm:$0xff]
        %v358 = vld [vmem:[%s340 + $0xc8] sm:$0xff]
        %v359 = vld [vmem:[%s340 + $0xd8] sm:$0xff]
        %v360 = vld [vmem:[%s340 + $0xe0] sm:$0xff]
        %v361 = vld [vmem:[%s340 + $0xf0] sm:$0xff]
        %v362 = vld [vmem:[%s340 + $0xf8] sm:$0xff]
        %v363 = vld [vmem:[%s340 + $0x108] sm:$0xff]
        %v364 = vld [vmem:[%s340 + $0x110] sm:$0xff]
        %v365 = vld [vmem:[%s340 + $0x120] sm:$0xff]
        %v366 = vld [vmem:[%s340 + $0x128] sm:$0xff]
        %v367 = vld [vmem:[%s340 + $0x138] sm:$0xff]
        %v368 = vld [vmem:[%s340 + $0x140] sm:$0xff]
        %v369 = vld [vmem:[%s340 + $0x150] sm:$0xff]
        %v370 = vld [vmem:[%s340 + $0x158] sm:$0xff]
        %v371 = vld [vmem:[%s340 + $0x168] sm:$0xff]
        %v372 = vld [vmem:[%s340 + $0x170] sm:$0xff]
        %v373 = vld [vmem:[%s340 + $0x1] sm:$0xff]
        %v374 = vld [vmem:[%s340 + $0x9] sm:$0xff]
        %v375 = vld [vmem:[%s340 + $0x19] sm:$0xff]
        %v376 = vld [vmem:[%s340 + $0x21] sm:$0xff]
        %v377 = vld [vmem:[%s340 + $0x31] sm:$0xff]
        %v378 = vld [vmem:[%s340 + $0x39] sm:$0xff]
        %v379 = vld [vmem:[%s340 + $0x49] sm:$0xff]
        %v380 = vld [vmem:[%s340 + $0x51] sm:$0xff]
        %v381 = vld [vmem:[%s340 + $0x61] sm:$0xff]
        %v382 = vld [vmem:[%s340 + $0x69] sm:$0xff]
        %v383 = vld [vmem:[%s340 + $0x79] sm:$0xff]
        %v384 = vld [vmem:[%s340 + $0x81] sm:$0xff]
        %v385 = vld [vmem:[%s340 + $0x91] sm:$0xff]
        %v386 = vld [vmem:[%s340 + $0x99] sm:$0xff]
        %v387 = vld [vmem:[%s340 + $0xa9] sm:$0xff]
        %v388 = vld [vmem:[%s340 + $0xb1] sm:$0xff]
        %v389 = vld [vmem:[%s340 + $0xc1] sm:$0xff]
        %v390 = vld [vmem:[%s340 + $0xc9] sm:$0xff]
        %v391 = vld [vmem:[%s340 + $0xd9] sm:$0xff]
        %v392 = vld [vmem:[%s340 + $0xe1] sm:$0xff]
        %v393 = vld [vmem:[%s340 + $0xf1] sm:$0xff]
        %v394 = vld [vmem:[%s340 + $0xf9] sm:$0xff]
        %v395 = vld [vmem:[%s340 + $0x109] sm:$0xff]
        %v396 = vld [vmem:[%s340 + $0x111] sm:$0xff]
        %v397 = vld [vmem:[%s340 + $0x121] sm:$0xff]
        %v398 = vld [vmem:[%s340 + $0x129] sm:$0xff]
        %v399 = vld [vmem:[%s340 + $0x139] sm:$0xff]
        %v400 = vld [vmem:[%s340 + $0x141] sm:$0xff]
        %v401 = vld [vmem:[%s340 + $0x151] sm:$0xff]
        %v402 = vld [vmem:[%s340 + $0x159] sm:$0xff]
        %v403 = vld [vmem:[%s340 + $0x169] sm:$0xff]
        %v404 = vld [vmem:[%s340 + $0x171] sm:$0xff]
        %v405 = vld [vmem:[%s340 + $0x2] sm:$0xff]
        %v406 = vld [vmem:[%s340 + $0xa] sm:$0xff]
        %v407 = vld [vmem:[%s340 + $0x1a] sm:$0xff]
        %v408 = vld [vmem:[%s340 + $0x22] sm:$0xff]
        %v409 = vld [vmem:[%s340 + $0x32] sm:$0xff]
        %v410 = vld [vmem:[%s340 + $0x3a] sm:$0xff]
        %v411 = vld [vmem:[%s340 + $0x4a] sm:$0xff]
        %v412 = vld [vmem:[%s340 + $0x52] sm:$0xff]
        %v413 = vld [vmem:[%s340 + $0x62] sm:$0xff]
        %v414 = vld [vmem:[%s340 + $0x6a] sm:$0xff]
        %v415 = vld [vmem:[%s340 + $0x7a] sm:$0xff]
        %v416 = vld [vmem:[%s340 + $0x82] sm:$0xff]
        %v417 = vld [vmem:[%s340 + $0x92] sm:$0xff]
        %v418 = vld [vmem:[%s340 + $0x9a] sm:$0xff]
        %v419 = vld [vmem:[%s340 + $0xaa] sm:$0xff]
        %v420 = vld [vmem:[%s340 + $0xb2] sm:$0xff]
        %v421 = vld [vmem:[%s340 + $0xc2] sm:$0xff]
        %v422 = vld [vmem:[%s340 + $0xca] sm:$0xff]
        %v423 = vld [vmem:[%s340 + $0xda] sm:$0xff]
        %v424 = vld [vmem:[%s340 + $0xe2] sm:$0xff]
        %v425 = vld [vmem:[%s340 + $0xf2] sm:$0xff]
        %v426 = vld [vmem:[%s340 + $0xfa] sm:$0xff]
        %v427 = vld [vmem:[%s340 + $0x10a] sm:$0xff]
        %v428 = vld [vmem:[%s340 + $0x112] sm:$0xff]
        %v429 = vld [vmem:[%s340 + $0x122] sm:$0xff]
        %v430 = vld [vmem:[%s340 + $0x12a] sm:$0xff]
        %v431 = vld [vmem:[%s340 + $0x13a] sm:$0xff]
        %v432 = vld [vmem:[%s340 + $0x142] sm:$0xff]
        %v433 = vld [vmem:[%s340 + $0x152] sm:$0xff]
        %v434 = vld [vmem:[%s340 + $0x15a] sm:$0xff]
        %v435 = vld [vmem:[%s340 + $0x16a] sm:$0xff]
        %v436 = vld [vmem:[%s340 + $0x172] sm:$0xff]
        %s437 = sadd.s32 %s239, 2
        %s438 = smul.u32 %s437, 24
        %s439 = scalar_lea.vmem %s236, %s438
        %v440 = vld [vmem:[%s439] sm:$0xff]
        %v441 = vld [vmem:[%s439 + $0x8] sm:$0xff]
        %v442 = vld [vmem:[%s439 + $0x18] sm:$0xff]
        %v443 = vld [vmem:[%s439 + $0x20] sm:$0xff]
        %v444 = vld [vmem:[%s439 + $0x30] sm:$0xff]
        %v445 = vld [vmem:[%s439 + $0x38] sm:$0xff]
        %v446 = vld [vmem:[%s439 + $0x48] sm:$0xff]
        %v447 = vld [vmem:[%s439 + $0x50] sm:$0xff]
        %v448 = vld [vmem:[%s439 + $0x60] sm:$0xff]
        %v449 = vld [vmem:[%s439 + $0x68] sm:$0xff]
        %v450 = vld [vmem:[%s439 + $0x78] sm:$0xff]
        %v451 = vld [vmem:[%s439 + $0x80] sm:$0xff]
        %v452 = vld [vmem:[%s439 + $0x90] sm:$0xff]
        %v453 = vld [vmem:[%s439 + $0x98] sm:$0xff]
        %v454 = vld [vmem:[%s439 + $0xa8] sm:$0xff]
        %v455 = vld [vmem:[%s439 + $0xb0] sm:$0xff]
        %v456 = vld [vmem:[%s439 + $0xc0] sm:$0xff]
        %v457 = vld [vmem:[%s439 + $0xc8] sm:$0xff]
        %v458 = vld [vmem:[%s439 + $0xd8] sm:$0xff]
        %v459 = vld [vmem:[%s439 + $0xe0] sm:$0xff]
        %v460 = vld [vmem:[%s439 + $0xf0] sm:$0xff]
        %v461 = vld [vmem:[%s439 + $0xf8] sm:$0xff]
        %v462 = vld [vmem:[%s439 + $0x108] sm:$0xff]
        %v463 = vld [vmem:[%s439 + $0x110] sm:$0xff]
        %v464 = vld [vmem:[%s439 + $0x120] sm:$0xff]
        %v465 = vld [vmem:[%s439 + $0x128] sm:$0xff]
        %v466 = vld [vmem:[%s439 + $0x138] sm:$0xff]
        %v467 = vld [vmem:[%s439 + $0x140] sm:$0xff]
        %v468 = vld [vmem:[%s439 + $0x150] sm:$0xff]
        %v469 = vld [vmem:[%s439 + $0x158] sm:$0xff]
        %v470 = vld [vmem:[%s439 + $0x168] sm:$0xff]
        %v471 = vld [vmem:[%s439 + $0x170] sm:$0xff]
        %v472 = vld [vmem:[%s439 + $0x1] sm:$0xff]
        %v473 = vld [vmem:[%s439 + $0x9] sm:$0xff]
        %v474 = vld [vmem:[%s439 + $0x19] sm:$0xff]
        %v475 = vld [vmem:[%s439 + $0x21] sm:$0xff]
        %v476 = vld [vmem:[%s439 + $0x31] sm:$0xff]
        %v477 = vld [vmem:[%s439 + $0x39] sm:$0xff]
        %v478 = vld [vmem:[%s439 + $0x49] sm:$0xff]
        %v479 = vld [vmem:[%s439 + $0x51] sm:$0xff]
        %v480 = vld [vmem:[%s439 + $0x61] sm:$0xff]
        %v481 = vld [vmem:[%s439 + $0x69] sm:$0xff]
        %v482 = vld [vmem:[%s439 + $0x79] sm:$0xff]
        %v483 = vld [vmem:[%s439 + $0x81] sm:$0xff]
        %v484 = vld [vmem:[%s439 + $0x91] sm:$0xff]
        %v485 = vld [vmem:[%s439 + $0x99] sm:$0xff]
        %v486 = vld [vmem:[%s439 + $0xa9] sm:$0xff]
        %v487 = vld [vmem:[%s439 + $0xb1] sm:$0xff]
        %v488 = vld [vmem:[%s439 + $0xc1] sm:$0xff]
        %v489 = vld [vmem:[%s439 + $0xc9] sm:$0xff]
        %v490 = vld [vmem:[%s439 + $0xd9] sm:$0xff]
        %v491 = vld [vmem:[%s439 + $0xe1] sm:$0xff]
        %v492 = vld [vmem:[%s439 + $0xf1] sm:$0xff]
        %v493 = vld [vmem:[%s439 + $0xf9] sm:$0xff]
        %v494 = vld [vmem:[%s439 + $0x109] sm:$0xff]
        %v495 = vld [vmem:[%s439 + $0x111] sm:$0xff]
        %v496 = vld [vmem:[%s439 + $0x121] sm:$0xff]
        %v497 = vld [vmem:[%s439 + $0x129] sm:$0xff]
        %v498 = vld [vmem:[%s439 + $0x139] sm:$0xff]
        %v499 = vld [vmem:[%s439 + $0x141] sm:$0xff]
        %v500 = vld [vmem:[%s439 + $0x151] sm:$0xff]
        %v501 = vld [vmem:[%s439 + $0x159] sm:$0xff]
        %v502 = vld [vmem:[%s439 + $0x169] sm:$0xff]
        %v503 = vld [vmem:[%s439 + $0x171] sm:$0xff]
        %v504 = vld [vmem:[%s439 + $0x2] sm:$0xff]
        %v505 = vld [vmem:[%s439 + $0xa] sm:$0xff]
        %v506 = vld [vmem:[%s439 + $0x1a] sm:$0xff]
        %v507 = vld [vmem:[%s439 + $0x22] sm:$0xff]
        %v508 = vld [vmem:[%s439 + $0x32] sm:$0xff]
        %v509 = vld [vmem:[%s439 + $0x3a] sm:$0xff]
        %v510 = vld [vmem:[%s439 + $0x4a] sm:$0xff]
        %v511 = vld [vmem:[%s439 + $0x52] sm:$0xff]
        %v512 = vld [vmem:[%s439 + $0x62] sm:$0xff]
        %v513 = vld [vmem:[%s439 + $0x6a] sm:$0xff]
        %v514 = vld [vmem:[%s439 + $0x7a] sm:$0xff]
        %v515 = vld [vmem:[%s439 + $0x82] sm:$0xff]
        %v516 = vld [vmem:[%s439 + $0x92] sm:$0xff]
        %v517 = vld [vmem:[%s439 + $0x9a] sm:$0xff]
        %v518 = vld [vmem:[%s439 + $0xaa] sm:$0xff]
        %v519 = vld [vmem:[%s439 + $0xb2] sm:$0xff]
        %v520 = vld [vmem:[%s439 + $0xc2] sm:$0xff]
        %v521 = vld [vmem:[%s439 + $0xca] sm:$0xff]
        %v522 = vld [vmem:[%s439 + $0xda] sm:$0xff]
        %v523 = vld [vmem:[%s439 + $0xe2] sm:$0xff]
        %v524 = vld [vmem:[%s439 + $0xf2] sm:$0xff]
        %v525 = vld [vmem:[%s439 + $0xfa] sm:$0xff]
        %v526 = vld [vmem:[%s439 + $0x10a] sm:$0xff]
        %v527 = vld [vmem:[%s439 + $0x112] sm:$0xff]
        %v528 = vld [vmem:[%s439 + $0x122] sm:$0xff]
        %v529 = vld [vmem:[%s439 + $0x12a] sm:$0xff]
        %v530 = vld [vmem:[%s439 + $0x13a] sm:$0xff]
        %v531 = vld [vmem:[%s439 + $0x142] sm:$0xff]
        %v532 = vld [vmem:[%s439 + $0x152] sm:$0xff]
        %v533 = vld [vmem:[%s439 + $0x15a] sm:$0xff]
        %v534 = vld [vmem:[%s439 + $0x16a] sm:$0xff]
        %v535 = vld [vmem:[%s439 + $0x172] sm:$0xff]
        %568 = vrot.lane.b32.xlu0 %v274, 3
        %v569 = vpop.permute.xlu0 %568
        %570 = vrot.lane.b32.xlu0 %v275, 3
        %v571 = vpop.permute.xlu0 %570
        %572 = vrot.lane.b32.xlu0 %v276, 3
        %v573 = vpop.permute.xlu0 %572
        %574 = vrot.lane.b32.xlu0 %v277, 3
        %v575 = vpop.permute.xlu0 %574
        %576 = vrot.lane.b32.xlu0 %v278, 3
        %v577 = vpop.permute.xlu0 %576
        %578 = vrot.lane.b32.xlu0 %v279, 3
        %v579 = vpop.permute.xlu0 %578
        %580 = vrot.lane.b32.xlu0 %v280, 3
        %v581 = vpop.permute.xlu0 %580
        %582 = vrot.lane.b32.xlu0 %v281, 3
        %v583 = vpop.permute.xlu0 %582
        %584 = vrot.lane.b32.xlu0 %v282, 3
        %v585 = vpop.permute.xlu0 %584
        %586 = vrot.lane.b32.xlu0 %v283, 3
        %v587 = vpop.permute.xlu0 %586
        %588 = vrot.lane.b32.xlu0 %v284, 3
        %v589 = vpop.permute.xlu0 %588
        %590 = vrot.lane.b32.xlu0 %v285, 3
        %v591 = vpop.permute.xlu0 %590
        %592 = vrot.lane.b32.xlu0 %v286, 3
        %v593 = vpop.permute.xlu0 %592
        %594 = vrot.lane.b32.xlu0 %v287, 3
        %v595 = vpop.permute.xlu0 %594
        %596 = vrot.lane.b32.xlu0 %v288, 3
        %v597 = vpop.permute.xlu0 %596
        %598 = vrot.lane.b32.xlu0 %v289, 3
        %v599 = vpop.permute.xlu0 %598
        %600 = vrot.lane.b32.xlu0 %v290, 3
        %v601 = vpop.permute.xlu0 %600
        %602 = vrot.lane.b32.xlu0 %v291, 3
        %v603 = vpop.permute.xlu0 %602
        %604 = vrot.lane.b32.xlu0 %v292, 3
        %v605 = vpop.permute.xlu0 %604
        %606 = vrot.lane.b32.xlu0 %v293, 3
        %v607 = vpop.permute.xlu0 %606
        %608 = vrot.lane.b32.xlu0 %v294, 3
        %v609 = vpop.permute.xlu0 %608
        %610 = vrot.lane.b32.xlu0 %v295, 3
        %v611 = vpop.permute.xlu0 %610
        %612 = vrot.lane.b32.xlu0 %v296, 3
        %v613 = vpop.permute.xlu0 %612
        %614 = vrot.lane.b32.xlu0 %v297, 3
        %v615 = vpop.permute.xlu0 %614
        %616 = vrot.lane.b32.xlu0 %v298, 3
        %v617 = vpop.permute.xlu0 %616
        %618 = vrot.lane.b32.xlu0 %v299, 3
        %v619 = vpop.permute.xlu0 %618
        %620 = vrot.lane.b32.xlu0 %v300, 3
        %v621 = vpop.permute.xlu0 %620
        %622 = vrot.lane.b32.xlu0 %v301, 3
        %v623 = vpop.permute.xlu0 %622
        %624 = vrot.lane.b32.xlu0 %v302, 3
        %v625 = vpop.permute.xlu0 %624
        %626 = vrot.lane.b32.xlu0 %v303, 3
        %v627 = vpop.permute.xlu0 %626
        %628 = vrot.lane.b32.xlu0 %v304, 3
        %v629 = vpop.permute.xlu0 %628
        %630 = vrot.lane.b32.xlu0 %v305, 3
        %v631 = vpop.permute.xlu0 %630
        %696 = vrot.lane.b32.xlu0 %v306, 6
        %v697 = vpop.permute.xlu0 %696
        %698 = vrot.lane.b32.xlu0 %v307, 6
        %v699 = vpop.permute.xlu0 %698
        %700 = vrot.lane.b32.xlu0 %v308, 6
        %v701 = vpop.permute.xlu0 %700
        %702 = vrot.lane.b32.xlu0 %v309, 6
        %v703 = vpop.permute.xlu0 %702
        %704 = vrot.lane.b32.xlu0 %v310, 6
        %v705 = vpop.permute.xlu0 %704
        %706 = vrot.lane.b32.xlu0 %v311, 6
        %v707 = vpop.permute.xlu0 %706
        %708 = vrot.lane.b32.xlu0 %v312, 6
        %v709 = vpop.permute.xlu0 %708
        %710 = vrot.lane.b32.xlu0 %v313, 6
        %v711 = vpop.permute.xlu0 %710
        %712 = vrot.lane.b32.xlu0 %v314, 6
        %v713 = vpop.permute.xlu0 %712
        %714 = vrot.lane.b32.xlu0 %v315, 6
        %v715 = vpop.permute.xlu0 %714
        %716 = vrot.lane.b32.xlu0 %v316, 6
        %v717 = vpop.permute.xlu0 %716
        %718 = vrot.lane.b32.xlu0 %v317, 6
        %v719 = vpop.permute.xlu0 %718
        %720 = vrot.lane.b32.xlu0 %v318, 6
        %v721 = vpop.permute.xlu0 %720
        %722 = vrot.lane.b32.xlu0 %v319, 6
        %v723 = vpop.permute.xlu0 %722
        %724 = vrot.lane.b32.xlu0 %v320, 6
        %v725 = vpop.permute.xlu0 %724
        %726 = vrot.lane.b32.xlu0 %v321, 6
        %v727 = vpop.permute.xlu0 %726
        %728 = vrot.lane.b32.xlu0 %v322, 6
        %v729 = vpop.permute.xlu0 %728
        %730 = vrot.lane.b32.xlu0 %v323, 6
        %v731 = vpop.permute.xlu0 %730
        %732 = vrot.lane.b32.xlu0 %v324, 6
        %v733 = vpop.permute.xlu0 %732
        %734 = vrot.lane.b32.xlu0 %v325, 6
        %v735 = vpop.permute.xlu0 %734
        %736 = vrot.lane.b32.xlu0 %v326, 6
        %v737 = vpop.permute.xlu0 %736
        %738 = vrot.lane.b32.xlu0 %v327, 6
        %v739 = vpop.permute.xlu0 %738
        %740 = vrot.lane.b32.xlu0 %v328, 6
        %v741 = vpop.permute.xlu0 %740
        %742 = vrot.lane.b32.xlu0 %v329, 6
        %v743 = vpop.permute.xlu0 %742
        %744 = vrot.lane.b32.xlu0 %v330, 6
        %v745 = vpop.permute.xlu0 %744
        %746 = vrot.lane.b32.xlu0 %v331, 6
        %v747 = vpop.permute.xlu0 %746
        %748 = vrot.lane.b32.xlu0 %v332, 6
        %v749 = vpop.permute.xlu0 %748
        %750 = vrot.lane.b32.xlu0 %v333, 6
        %v751 = vpop.permute.xlu0 %750
        %752 = vrot.lane.b32.xlu0 %v334, 6
        %v753 = vpop.permute.xlu0 %752
        %754 = vrot.lane.b32.xlu0 %v335, 6
        %v755 = vpop.permute.xlu0 %754
        %756 = vrot.lane.b32.xlu0 %v336, 6
        %v757 = vpop.permute.xlu0 %756
        %758 = vrot.lane.b32.xlu0 %v337, 6
        %v759 = vpop.permute.xlu0 %758
        %824 = vrot.lane.b32.xlu0 %v341, 9
        %v825 = vpop.permute.xlu0 %824
        %826 = vrot.lane.b32.xlu0 %v342, 9
        %v827 = vpop.permute.xlu0 %826
        %828 = vrot.lane.b32.xlu0 %v343, 9
        %v829 = vpop.permute.xlu0 %828
        %830 = vrot.lane.b32.xlu0 %v344, 9
        %v831 = vpop.permute.xlu0 %830
        %832 = vrot.lane.b32.xlu0 %v345, 9
        %v833 = vpop.permute.xlu0 %832
        %834 = vrot.lane.b32.xlu0 %v346, 9
        %v835 = vpop.permute.xlu0 %834
        %836 = vrot.lane.b32.xlu0 %v347, 9
        %v837 = vpop.permute.xlu0 %836
        %838 = vrot.lane.b32.xlu0 %v348, 9
        %v839 = vpop.permute.xlu0 %838
        %840 = vrot.lane.b32.xlu0 %v349, 9
        %v841 = vpop.permute.xlu0 %840
        %842 = vrot.lane.b32.xlu0 %v350, 9
        %v843 = vpop.permute.xlu0 %842
        %844 = vrot.lane.b32.xlu0 %v351, 9
        %v845 = vpop.permute.xlu0 %844
        %846 = vrot.lane.b32.xlu0 %v352, 9
        %v847 = vpop.permute.xlu0 %846
        %848 = vrot.lane.b32.xlu0 %v353, 9
        %v849 = vpop.permute.xlu0 %848
        %850 = vrot.lane.b32.xlu0 %v354, 9
        %v851 = vpop.permute.xlu0 %850
        %852 = vrot.lane.b32.xlu0 %v355, 9
        %v853 = vpop.permute.xlu0 %852
        %854 = vrot.lane.b32.xlu0 %v356, 9
        %v855 = vpop.permute.xlu0 %854
        %856 = vrot.lane.b32.xlu0 %v357, 9
        %v857 = vpop.permute.xlu0 %856
        %858 = vrot.lane.b32.xlu0 %v358, 9
        %v859 = vpop.permute.xlu0 %858
        %860 = vrot.lane.b32.xlu0 %v359, 9
        %v861 = vpop.permute.xlu0 %860
        %862 = vrot.lane.b32.xlu0 %v360, 9
        %v863 = vpop.permute.xlu0 %862
        %864 = vrot.lane.b32.xlu0 %v361, 9
        %v865 = vpop.permute.xlu0 %864
        %866 = vrot.lane.b32.xlu0 %v362, 9
        %v867 = vpop.permute.xlu0 %866
        %868 = vrot.lane.b32.xlu0 %v363, 9
        %v869 = vpop.permute.xlu0 %868
        %870 = vrot.lane.b32.xlu0 %v364, 9
        %v871 = vpop.permute.xlu0 %870
        %872 = vrot.lane.b32.xlu0 %v365, 9
        %v873 = vpop.permute.xlu0 %872
        %874 = vrot.lane.b32.xlu0 %v366, 9
        %v875 = vpop.permute.xlu0 %874
        %876 = vrot.lane.b32.xlu0 %v367, 9
        %v877 = vpop.permute.xlu0 %876
        %878 = vrot.lane.b32.xlu0 %v368, 9
        %v879 = vpop.permute.xlu0 %878
        %880 = vrot.lane.b32.xlu0 %v369, 9
        %v881 = vpop.permute.xlu0 %880
        %882 = vrot.lane.b32.xlu0 %v370, 9
        %v883 = vpop.permute.xlu0 %882
        %884 = vrot.lane.b32.xlu0 %v371, 9
        %v885 = vpop.permute.xlu0 %884
        %886 = vrot.lane.b32.xlu0 %v372, 9
        %v887 = vpop.permute.xlu0 %886
        %952 = vrot.lane.b32.xlu0 %v373, 12
        %v953 = vpop.permute.xlu0 %952
        %954 = vrot.lane.b32.xlu0 %v374, 12
        %v955 = vpop.permute.xlu0 %954
        %956 = vrot.lane.b32.xlu0 %v375, 12
        %v957 = vpop.permute.xlu0 %956
        %958 = vrot.lane.b32.xlu0 %v376, 12
        %v959 = vpop.permute.xlu0 %958
        %960 = vrot.lane.b32.xlu0 %v377, 12
        %v961 = vpop.permute.xlu0 %960
        %962 = vrot.lane.b32.xlu0 %v378, 12
        %v963 = vpop.permute.xlu0 %962
        %964 = vrot.lane.b32.xlu0 %v379, 12
        %v965 = vpop.permute.xlu0 %964
        %966 = vrot.lane.b32.xlu0 %v380, 12
        %v967 = vpop.permute.xlu0 %966
        %968 = vrot.lane.b32.xlu0 %v381, 12
        %v969 = vpop.permute.xlu0 %968
        %970 = vrot.lane.b32.xlu0 %v382, 12
        %v971 = vpop.permute.xlu0 %970
        %972 = vrot.lane.b32.xlu0 %v383, 12
        %v973 = vpop.permute.xlu0 %972
        %974 = vrot.lane.b32.xlu0 %v384, 12
        %v975 = vpop.permute.xlu0 %974
        %976 = vrot.lane.b32.xlu0 %v385, 12
        %v977 = vpop.permute.xlu0 %976
        %978 = vrot.lane.b32.xlu0 %v386, 12
        %v979 = vpop.permute.xlu0 %978
        %980 = vrot.lane.b32.xlu0 %v387, 12
        %v981 = vpop.permute.xlu0 %980
        %982 = vrot.lane.b32.xlu0 %v388, 12
        %v983 = vpop.permute.xlu0 %982
        %984 = vrot.lane.b32.xlu0 %v389, 12
        %v985 = vpop.permute.xlu0 %984
        %986 = vrot.lane.b32.xlu0 %v390, 12
        %v987 = vpop.permute.xlu0 %986
        %988 = vrot.lane.b32.xlu0 %v391, 12
        %v989 = vpop.permute.xlu0 %988
        %990 = vrot.lane.b32.xlu0 %v392, 12
        %v991 = vpop.permute.xlu0 %990
        %992 = vrot.lane.b32.xlu0 %v393, 12
        %v993 = vpop.permute.xlu0 %992
        %994 = vrot.lane.b32.xlu0 %v394, 12
        %v995 = vpop.permute.xlu0 %994
        %996 = vrot.lane.b32.xlu0 %v395, 12
        %v997 = vpop.permute.xlu0 %996
        %998 = vrot.lane.b32.xlu0 %v396, 12
        %v999 = vpop.permute.xlu0 %998
        %1000 = vrot.lane.b32.xlu0 %v397, 12
        %v1001 = vpop.permute.xlu0 %1000
        %1002 = vrot.lane.b32.xlu0 %v398, 12
        %v1003 = vpop.permute.xlu0 %1002
        %1004 = vrot.lane.b32.xlu0 %v399, 12
        %v1005 = vpop.permute.xlu0 %1004
        %1006 = vrot.lane.b32.xlu0 %v400, 12
        %v1007 = vpop.permute.xlu0 %1006
        %1008 = vrot.lane.b32.xlu0 %v401, 12
        %v1009 = vpop.permute.xlu0 %1008
        %1010 = vrot.lane.b32.xlu0 %v402, 12
        %v1011 = vpop.permute.xlu0 %1010
        %1012 = vrot.lane.b32.xlu0 %v403, 12
        %v1013 = vpop.permute.xlu0 %1012
        %1014 = vrot.lane.b32.xlu0 %v404, 12
        %v1015 = vpop.permute.xlu0 %1014
        %1080 = vrot.lane.b32.xlu0 %v405, 15
        %v1081 = vpop.permute.xlu0 %1080
        %1082 = vrot.lane.b32.xlu0 %v406, 15
        %v1083 = vpop.permute.xlu0 %1082
        %1084 = vrot.lane.b32.xlu0 %v407, 15
        %v1085 = vpop.permute.xlu0 %1084
        %1086 = vrot.lane.b32.xlu0 %v408, 15
        %v1087 = vpop.permute.xlu0 %1086
        %1088 = vrot.lane.b32.xlu0 %v409, 15
        %v1089 = vpop.permute.xlu0 %1088
        %1090 = vrot.lane.b32.xlu0 %v410, 15
        %v1091 = vpop.permute.xlu0 %1090
        %1092 = vrot.lane.b32.xlu0 %v411, 15
        %v1093 = vpop.permute.xlu0 %1092
        %1094 = vrot.lane.b32.xlu0 %v412, 15
        %v1095 = vpop.permute.xlu0 %1094
        %1096 = vrot.lane.b32.xlu0 %v413, 15
        %v1097 = vpop.permute.xlu0 %1096
        %1098 = vrot.lane.b32.xlu0 %v414, 15
        %v1099 = vpop.permute.xlu0 %1098
        %1100 = vrot.lane.b32.xlu0 %v415, 15
        %v1101 = vpop.permute.xlu0 %1100
        %1102 = vrot.lane.b32.xlu0 %v416, 15
        %v1103 = vpop.permute.xlu0 %1102
        %1104 = vrot.lane.b32.xlu0 %v417, 15
        %v1105 = vpop.permute.xlu0 %1104
        %1106 = vrot.lane.b32.xlu0 %v418, 15
        %v1107 = vpop.permute.xlu0 %1106
        %1108 = vrot.lane.b32.xlu0 %v419, 15
        %v1109 = vpop.permute.xlu0 %1108
        %1110 = vrot.lane.b32.xlu0 %v420, 15
        %v1111 = vpop.permute.xlu0 %1110
        %1112 = vrot.lane.b32.xlu0 %v421, 15
        %v1113 = vpop.permute.xlu0 %1112
        %1114 = vrot.lane.b32.xlu0 %v422, 15
        %v1115 = vpop.permute.xlu0 %1114
        %1116 = vrot.lane.b32.xlu0 %v423, 15
        %v1117 = vpop.permute.xlu0 %1116
        %1118 = vrot.lane.b32.xlu0 %v424, 15
        %v1119 = vpop.permute.xlu0 %1118
        %1120 = vrot.lane.b32.xlu0 %v425, 15
        %v1121 = vpop.permute.xlu0 %1120
        %1122 = vrot.lane.b32.xlu0 %v426, 15
        %v1123 = vpop.permute.xlu0 %1122
        %1124 = vrot.lane.b32.xlu0 %v427, 15
        %v1125 = vpop.permute.xlu0 %1124
        %1126 = vrot.lane.b32.xlu0 %v428, 15
        %v1127 = vpop.permute.xlu0 %1126
        %1128 = vrot.lane.b32.xlu0 %v429, 15
        %v1129 = vpop.permute.xlu0 %1128
        %1130 = vrot.lane.b32.xlu0 %v430, 15
        %v1131 = vpop.permute.xlu0 %1130
        %1132 = vrot.lane.b32.xlu0 %v431, 15
        %v1133 = vpop.permute.xlu0 %1132
        %1134 = vrot.lane.b32.xlu0 %v432, 15
        %v1135 = vpop.permute.xlu0 %1134
        %1136 = vrot.lane.b32.xlu0 %v433, 15
        %v1137 = vpop.permute.xlu0 %1136
        %1138 = vrot.lane.b32.xlu0 %v434, 15
        %v1139 = vpop.permute.xlu0 %1138
        %1140 = vrot.lane.b32.xlu0 %v435, 15
        %v1141 = vpop.permute.xlu0 %1140
        %1142 = vrot.lane.b32.xlu0 %v436, 15
        %v1143 = vpop.permute.xlu0 %1142
        %1208 = vrot.lane.b32.xlu0 %v440, 18
        %v1209 = vpop.permute.xlu0 %1208
        %1210 = vrot.lane.b32.xlu0 %v441, 18
        %v1211 = vpop.permute.xlu0 %1210
        %1212 = vrot.lane.b32.xlu0 %v442, 18
        %v1213 = vpop.permute.xlu0 %1212
        %1214 = vrot.lane.b32.xlu0 %v443, 18
        %v1215 = vpop.permute.xlu0 %1214
        %1216 = vrot.lane.b32.xlu0 %v444, 18
        %v1217 = vpop.permute.xlu0 %1216
        %1218 = vrot.lane.b32.xlu0 %v445, 18
        %v1219 = vpop.permute.xlu0 %1218
        %1220 = vrot.lane.b32.xlu0 %v446, 18
        %v1221 = vpop.permute.xlu0 %1220
        %1222 = vrot.lane.b32.xlu0 %v447, 18
        %v1223 = vpop.permute.xlu0 %1222
        %1224 = vrot.lane.b32.xlu0 %v448, 18
        %v1225 = vpop.permute.xlu0 %1224
        %1226 = vrot.lane.b32.xlu0 %v449, 18
        %v1227 = vpop.permute.xlu0 %1226
        %1228 = vrot.lane.b32.xlu0 %v450, 18
        %v1229 = vpop.permute.xlu0 %1228
        %1230 = vrot.lane.b32.xlu0 %v451, 18
        %v1231 = vpop.permute.xlu0 %1230
        %1232 = vrot.lane.b32.xlu0 %v452, 18
        %v1233 = vpop.permute.xlu0 %1232
        %1234 = vrot.lane.b32.xlu0 %v453, 18
        %v1235 = vpop.permute.xlu0 %1234
        %1236 = vrot.lane.b32.xlu0 %v454, 18
        %v1237 = vpop.permute.xlu0 %1236
        %1238 = vrot.lane.b32.xlu0 %v455, 18
        %v1239 = vpop.permute.xlu0 %1238
        %1240 = vrot.lane.b32.xlu0 %v456, 18
        %v1241 = vpop.permute.xlu0 %1240
        %1242 = vrot.lane.b32.xlu0 %v457, 18
        %v1243 = vpop.permute.xlu0 %1242
        %1244 = vrot.lane.b32.xlu0 %v458, 18
        %v1245 = vpop.permute.xlu0 %1244
        %1246 = vrot.lane.b32.xlu0 %v459, 18
        %v1247 = vpop.permute.xlu0 %1246
        %1248 = vrot.lane.b32.xlu0 %v460, 18
        %v1249 = vpop.permute.xlu0 %1248
        %1250 = vrot.lane.b32.xlu0 %v461, 18
        %v1251 = vpop.permute.xlu0 %1250
        %1252 = vrot.lane.b32.xlu0 %v462, 18
        %v1253 = vpop.permute.xlu0 %1252
        %1254 = vrot.lane.b32.xlu0 %v463, 18
        %v1255 = vpop.permute.xlu0 %1254
        %1256 = vrot.lane.b32.xlu0 %v464, 18
        %v1257 = vpop.permute.xlu0 %1256
        %1258 = vrot.lane.b32.xlu0 %v465, 18
        %v1259 = vpop.permute.xlu0 %1258
        %1260 = vrot.lane.b32.xlu0 %v466, 18
        %v1261 = vpop.permute.xlu0 %1260
        %1262 = vrot.lane.b32.xlu0 %v467, 18
        %v1263 = vpop.permute.xlu0 %1262
        %1264 = vrot.lane.b32.xlu0 %v468, 18
        %v1265 = vpop.permute.xlu0 %1264
        %1266 = vrot.lane.b32.xlu0 %v469, 18
        %v1267 = vpop.permute.xlu0 %1266
        %1268 = vrot.lane.b32.xlu0 %v470, 18
        %v1269 = vpop.permute.xlu0 %1268
        %1270 = vrot.lane.b32.xlu0 %v471, 18
        %v1271 = vpop.permute.xlu0 %1270
        %1336 = vrot.lane.b32.xlu0 %v472, 21
        %v1337 = vpop.permute.xlu0 %1336
        %1338 = vrot.lane.b32.xlu0 %v473, 21
        %v1339 = vpop.permute.xlu0 %1338
        %1340 = vrot.lane.b32.xlu0 %v474, 21
        %v1341 = vpop.permute.xlu0 %1340
        %1342 = vrot.lane.b32.xlu0 %v475, 21
        %v1343 = vpop.permute.xlu0 %1342
        %1344 = vrot.lane.b32.xlu0 %v476, 21
        %v1345 = vpop.permute.xlu0 %1344
        %1346 = vrot.lane.b32.xlu0 %v477, 21
        %v1347 = vpop.permute.xlu0 %1346
        %1348 = vrot.lane.b32.xlu0 %v478, 21
        %v1349 = vpop.permute.xlu0 %1348
        %1350 = vrot.lane.b32.xlu0 %v479, 21
        %v1351 = vpop.permute.xlu0 %1350
        %1352 = vrot.lane.b32.xlu0 %v480, 21
        %v1353 = vpop.permute.xlu0 %1352
        %1354 = vrot.lane.b32.xlu0 %v481, 21
        %v1355 = vpop.permute.xlu0 %1354
        %1356 = vrot.lane.b32.xlu0 %v482, 21
        %v1357 = vpop.permute.xlu0 %1356
        %1358 = vrot.lane.b32.xlu0 %v483, 21
        %v1359 = vpop.permute.xlu0 %1358
        %1360 = vrot.lane.b32.xlu0 %v484, 21
        %v1361 = vpop.permute.xlu0 %1360
        %1362 = vrot.lane.b32.xlu0 %v485, 21
        %v1363 = vpop.permute.xlu0 %1362
        %1364 = vrot.lane.b32.xlu0 %v486, 21
        %v1365 = vpop.permute.xlu0 %1364
        %1366 = vrot.lane.b32.xlu0 %v487, 21
        %v1367 = vpop.permute.xlu0 %1366
        %1368 = vrot.lane.b32.xlu0 %v488, 21
        %v1369 = vpop.permute.xlu0 %1368
        %1370 = vrot.lane.b32.xlu0 %v489, 21
        %v1371 = vpop.permute.xlu0 %1370
        %1372 = vrot.lane.b32.xlu0 %v490, 21
        %v1373 = vpop.permute.xlu0 %1372
        %1374 = vrot.lane.b32.xlu0 %v491, 21
        %v1375 = vpop.permute.xlu0 %1374
        %1376 = vrot.lane.b32.xlu0 %v492, 21
        %v1377 = vpop.permute.xlu0 %1376
        %1378 = vrot.lane.b32.xlu0 %v493, 21
        %v1379 = vpop.permute.xlu0 %1378
        %1380 = vrot.lane.b32.xlu0 %v494, 21
        %v1381 = vpop.permute.xlu0 %1380
        %1382 = vrot.lane.b32.xlu0 %v495, 21
        %v1383 = vpop.permute.xlu0 %1382
        %1384 = vrot.lane.b32.xlu0 %v496, 21
        %v1385 = vpop.permute.xlu0 %1384
        %1386 = vrot.lane.b32.xlu0 %v497, 21
        %v1387 = vpop.permute.xlu0 %1386
        %1388 = vrot.lane.b32.xlu0 %v498, 21
        %v1389 = vpop.permute.xlu0 %1388
        %1390 = vrot.lane.b32.xlu0 %v499, 21
        %v1391 = vpop.permute.xlu0 %1390
        %1392 = vrot.lane.b32.xlu0 %v500, 21
        %v1393 = vpop.permute.xlu0 %1392
        %1394 = vrot.lane.b32.xlu0 %v501, 21
        %v1395 = vpop.permute.xlu0 %1394
        %1396 = vrot.lane.b32.xlu0 %v502, 21
        %v1397 = vpop.permute.xlu0 %1396
        %1398 = vrot.lane.b32.xlu0 %v503, 21
        %v1399 = vpop.permute.xlu0 %1398
        %1464 = vrot.lane.b32.xlu0 %v504, 24
        %v1465 = vpop.permute.xlu0 %1464
        %1466 = vrot.lane.b32.xlu0 %v505, 24
        %v1467 = vpop.permute.xlu0 %1466
        %1468 = vrot.lane.b32.xlu0 %v506, 24
        %v1469 = vpop.permute.xlu0 %1468
        %1470 = vrot.lane.b32.xlu0 %v507, 24
        %v1471 = vpop.permute.xlu0 %1470
        %1472 = vrot.lane.b32.xlu0 %v508, 24
        %v1473 = vpop.permute.xlu0 %1472
        %1474 = vrot.lane.b32.xlu0 %v509, 24
        %v1475 = vpop.permute.xlu0 %1474
        %1476 = vrot.lane.b32.xlu0 %v510, 24
        %v1477 = vpop.permute.xlu0 %1476
        %1478 = vrot.lane.b32.xlu0 %v511, 24
        %v1479 = vpop.permute.xlu0 %1478
        %1480 = vrot.lane.b32.xlu0 %v512, 24
        %v1481 = vpop.permute.xlu0 %1480
        %1482 = vrot.lane.b32.xlu0 %v513, 24
        %v1483 = vpop.permute.xlu0 %1482
        %1484 = vrot.lane.b32.xlu0 %v514, 24
        %v1485 = vpop.permute.xlu0 %1484
        %1486 = vrot.lane.b32.xlu0 %v515, 24
        %v1487 = vpop.permute.xlu0 %1486
        %1488 = vrot.lane.b32.xlu0 %v516, 24
        %v1489 = vpop.permute.xlu0 %1488
        %1490 = vrot.lane.b32.xlu0 %v517, 24
        %v1491 = vpop.permute.xlu0 %1490
        %1492 = vrot.lane.b32.xlu0 %v518, 24
        %v1493 = vpop.permute.xlu0 %1492
        %1494 = vrot.lane.b32.xlu0 %v519, 24
        %v1495 = vpop.permute.xlu0 %1494
        %1496 = vrot.lane.b32.xlu0 %v520, 24
        %v1497 = vpop.permute.xlu0 %1496
        %1498 = vrot.lane.b32.xlu0 %v521, 24
        %v1499 = vpop.permute.xlu0 %1498
        %1500 = vrot.lane.b32.xlu0 %v522, 24
        %v1501 = vpop.permute.xlu0 %1500
        %1502 = vrot.lane.b32.xlu0 %v523, 24
        %v1503 = vpop.permute.xlu0 %1502
        %1504 = vrot.lane.b32.xlu0 %v524, 24
        %v1505 = vpop.permute.xlu0 %1504
        %1506 = vrot.lane.b32.xlu0 %v525, 24
        %v1507 = vpop.permute.xlu0 %1506
        %1508 = vrot.lane.b32.xlu0 %v526, 24
        %v1509 = vpop.permute.xlu0 %1508
        %1510 = vrot.lane.b32.xlu0 %v527, 24
        %v1511 = vpop.permute.xlu0 %1510
        %1512 = vrot.lane.b32.xlu0 %v528, 24
        %v1513 = vpop.permute.xlu0 %1512
        %1514 = vrot.lane.b32.xlu0 %v529, 24
        %v1515 = vpop.permute.xlu0 %1514
        %1516 = vrot.lane.b32.xlu0 %v530, 24
        %v1517 = vpop.permute.xlu0 %1516
        %1518 = vrot.lane.b32.xlu0 %v531, 24
        %v1519 = vpop.permute.xlu0 %1518
        %1520 = vrot.lane.b32.xlu0 %v532, 24
        %v1521 = vpop.permute.xlu0 %1520
        %1522 = vrot.lane.b32.xlu0 %v533, 24
        %v1523 = vpop.permute.xlu0 %1522
        %1524 = vrot.lane.b32.xlu0 %v534, 24
        %v1525 = vpop.permute.xlu0 %1524
        %1526 = vrot.lane.b32.xlu0 %v535, 24
        %v1527 = vpop.permute.xlu0 %1526
        %vm1560 = vcmask 23552
        %v1561 = vsel %vm1560, %v242, %v569
        %v1562 = vsel %vm1560, %v243, %v571
        %v1563 = vsel %vm1560, %v244, %v573
        %v1564 = vsel %vm1560, %v245, %v575
        %v1565 = vsel %vm1560, %v246, %v577
        %v1566 = vsel %vm1560, %v247, %v579
        %v1567 = vsel %vm1560, %v248, %v581
        %v1568 = vsel %vm1560, %v249, %v583
        %v1569 = vsel %vm1560, %v250, %v585
        %v1570 = vsel %vm1560, %v251, %v587
        %v1571 = vsel %vm1560, %v252, %v589
        %v1572 = vsel %vm1560, %v253, %v591
        %v1573 = vsel %vm1560, %v254, %v593
        %v1574 = vsel %vm1560, %v255, %v595
        %v1575 = vsel %vm1560, %v256, %v597
        %v1576 = vsel %vm1560, %v257, %v599
        %v1577 = vsel %vm1560, %v258, %v601
        %v1578 = vsel %vm1560, %v259, %v603
        %v1579 = vsel %vm1560, %v260, %v605
        %v1580 = vsel %vm1560, %v261, %v607
        %v1581 = vsel %vm1560, %v262, %v609
        %v1582 = vsel %vm1560, %v263, %v611
        %v1583 = vsel %vm1560, %v264, %v613
        %v1584 = vsel %vm1560, %v265, %v615
        %v1585 = vsel %vm1560, %v266, %v617
        %v1586 = vsel %vm1560, %v267, %v619
        %v1587 = vsel %vm1560, %v268, %v621
        %v1588 = vsel %vm1560, %v269, %v623
        %v1589 = vsel %vm1560, %v270, %v625
        %v1590 = vsel %vm1560, %v271, %v627
        %v1591 = vsel %vm1560, %v272, %v629
        %v1592 = vsel %vm1560, %v273, %v631
        %vm1593 = vcmask 48128
        %v1594 = vsel %vm1593, %v1561, %v697
        %v1595 = vsel %vm1593, %v1562, %v699
        %v1596 = vsel %vm1593, %v1563, %v701
        %v1597 = vsel %vm1593, %v1564, %v703
        %v1598 = vsel %vm1593, %v1565, %v705
        %v1599 = vsel %vm1593, %v1566, %v707
        %v1600 = vsel %vm1593, %v1567, %v709
        %v1601 = vsel %vm1593, %v1568, %v711
        %v1602 = vsel %vm1593, %v1569, %v713
        %v1603 = vsel %vm1593, %v1570, %v715
        %v1604 = vsel %vm1593, %v1571, %v717
        %v1605 = vsel %vm1593, %v1572, %v719
        %v1606 = vsel %vm1593, %v1573, %v721
        %v1607 = vsel %vm1593, %v1574, %v723
        %v1608 = vsel %vm1593, %v1575, %v725
        %v1609 = vsel %vm1593, %v1576, %v727
        %v1610 = vsel %vm1593, %v1577, %v729
        %v1611 = vsel %vm1593, %v1578, %v731
        %v1612 = vsel %vm1593, %v1579, %v733
        %v1613 = vsel %vm1593, %v1580, %v735
        %v1614 = vsel %vm1593, %v1581, %v737
        %v1615 = vsel %vm1593, %v1582, %v739
        %v1616 = vsel %vm1593, %v1583, %v741
        %v1617 = vsel %vm1593, %v1584, %v743
        %v1618 = vsel %vm1593, %v1585, %v745
        %v1619 = vsel %vm1593, %v1586, %v747
        %v1620 = vsel %vm1593, %v1587, %v749
        %v1621 = vsel %vm1593, %v1588, %v751
        %v1622 = vsel %vm1593, %v1589, %v753
        %v1623 = vsel %vm1593, %v1590, %v755
        %v1624 = vsel %vm1593, %v1591, %v757
        %v1625 = vsel %vm1593, %v1592, %v759
        %vm1626 = vcmask 72704
        %v1627 = vsel %vm1626, %v1594, %v825
        %v1628 = vsel %vm1626, %v1595, %v827
        %v1629 = vsel %vm1626, %v1596, %v829
        %v1630 = vsel %vm1626, %v1597, %v831
        %v1631 = vsel %vm1626, %v1598, %v833
        %v1632 = vsel %vm1626, %v1599, %v835
        %v1633 = vsel %vm1626, %v1600, %v837
        %v1634 = vsel %vm1626, %v1601, %v839
        %v1635 = vsel %vm1626, %v1602, %v841
        %v1636 = vsel %vm1626, %v1603, %v843
        %v1637 = vsel %vm1626, %v1604, %v845
        %v1638 = vsel %vm1626, %v1605, %v847
        %v1639 = vsel %vm1626, %v1606, %v849
        %v1640 = vsel %vm1626, %v1607, %v851
        %v1641 = vsel %vm1626, %v1608, %v853
        %v1642 = vsel %vm1626, %v1609, %v855
        %v1643 = vsel %vm1626, %v1610, %v857
        %v1644 = vsel %vm1626, %v1611, %v859
        %v1645 = vsel %vm1626, %v1612, %v861
        %v1646 = vsel %vm1626, %v1613, %v863
        %v1647 = vsel %vm1626, %v1614, %v865
        %v1648 = vsel %vm1626, %v1615, %v867
        %v1649 = vsel %vm1626, %v1616, %v869
        %v1650 = vsel %vm1626, %v1617, %v871
        %v1651 = vsel %vm1626, %v1618, %v873
        %v1652 = vsel %vm1626, %v1619, %v875
        %v1653 = vsel %vm1626, %v1620, %v877
        %v1654 = vsel %vm1626, %v1621, %v879
        %v1655 = vsel %vm1626, %v1622, %v881
        %v1656 = vsel %vm1626, %v1623, %v883
        %v1657 = vsel %vm1626, %v1624, %v885
        %v1658 = vsel %vm1626, %v1625, %v887
        %vm1659 = vcmask 97280
        %v1660 = vsel %vm1659, %v1627, %v953
        %v1661 = vsel %vm1659, %v1628, %v955
        %v1662 = vsel %vm1659, %v1629, %v957
        %v1663 = vsel %vm1659, %v1630, %v959
        %v1664 = vsel %vm1659, %v1631, %v961
        %v1665 = vsel %vm1659, %v1632, %v963
        %v1666 = vsel %vm1659, %v1633, %v965
        %v1667 = vsel %vm1659, %v1634, %v967
        %v1668 = vsel %vm1659, %v1635, %v969
        %v1669 = vsel %vm1659, %v1636, %v971
        %v1670 = vsel %vm1659, %v1637, %v973
        %v1671 = vsel %vm1659, %v1638, %v975
        %v1672 = vsel %vm1659, %v1639, %v977
        %v1673 = vsel %vm1659, %v1640, %v979
        %v1674 = vsel %vm1659, %v1641, %v981
        %v1675 = vsel %vm1659, %v1642, %v983
        %v1676 = vsel %vm1659, %v1643, %v985
        %v1677 = vsel %vm1659, %v1644, %v987
        %v1678 = vsel %vm1659, %v1645, %v989
        %v1679 = vsel %vm1659, %v1646, %v991
        %v1680 = vsel %vm1659, %v1647, %v993
        %v1681 = vsel %vm1659, %v1648, %v995
        %v1682 = vsel %vm1659, %v1649, %v997
        %v1683 = vsel %vm1659, %v1650, %v999
        %v1684 = vsel %vm1659, %v1651, %v1001
        %v1685 = vsel %vm1659, %v1652, %v1003
        %v1686 = vsel %vm1659, %v1653, %v1005
        %v1687 = vsel %vm1659, %v1654, %v1007
        %v1688 = vsel %vm1659, %v1655, %v1009
        %v1689 = vsel %vm1659, %v1656, %v1011
        %v1690 = vsel %vm1659, %v1657, %v1013
        %v1691 = vsel %vm1659, %v1658, %v1015
        %vm1692 = vcmask 121856
        %v1693 = vsel %vm1692, %v1660, %v1081
        %v1694 = vsel %vm1692, %v1661, %v1083
        %v1695 = vsel %vm1692, %v1662, %v1085
        %v1696 = vsel %vm1692, %v1663, %v1087
        %v1697 = vsel %vm1692, %v1664, %v1089
        %v1698 = vsel %vm1692, %v1665, %v1091
        %v1699 = vsel %vm1692, %v1666, %v1093
        %v1700 = vsel %vm1692, %v1667, %v1095
        %v1701 = vsel %vm1692, %v1668, %v1097
        %v1702 = vsel %vm1692, %v1669, %v1099
        %v1703 = vsel %vm1692, %v1670, %v1101
        %v1704 = vsel %vm1692, %v1671, %v1103
        %v1705 = vsel %vm1692, %v1672, %v1105
        %v1706 = vsel %vm1692, %v1673, %v1107
        %v1707 = vsel %vm1692, %v1674, %v1109
        %v1708 = vsel %vm1692, %v1675, %v1111
        %v1709 = vsel %vm1692, %v1676, %v1113
        %v1710 = vsel %vm1692, %v1677, %v1115
        %v1711 = vsel %vm1692, %v1678, %v1117
        %v1712 = vsel %vm1692, %v1679, %v1119
        %v1713 = vsel %vm1692, %v1680, %v1121
        %v1714 = vsel %vm1692, %v1681, %v1123
        %v1715 = vsel %vm1692, %v1682, %v1125
        %v1716 = vsel %vm1692, %v1683, %v1127
        %v1717 = vsel %vm1692, %v1684, %v1129
        %v1718 = vsel %vm1692, %v1685, %v1131
        %v1719 = vsel %vm1692, %v1686, %v1133
        %v1720 = vsel %vm1692, %v1687, %v1135
        %v1721 = vsel %vm1692, %v1688, %v1137
        %v1722 = vsel %vm1692, %v1689, %v1139
        %v1723 = vsel %vm1692, %v1690, %v1141
        %v1724 = vsel %vm1692, %v1691, %v1143
        %vm1725 = vcmask 146432
        %v1726 = vsel %vm1725, %v1693, %v1209
        %v1727 = vsel %vm1725, %v1694, %v1211
        %v1728 = vsel %vm1725, %v1695, %v1213
        %v1729 = vsel %vm1725, %v1696, %v1215
        %v1730 = vsel %vm1725, %v1697, %v1217
        %v1731 = vsel %vm1725, %v1698, %v1219
        %v1732 = vsel %vm1725, %v1699, %v1221
        %v1733 = vsel %vm1725, %v1700, %v1223
        %v1734 = vsel %vm1725, %v1701, %v1225
        %v1735 = vsel %vm1725, %v1702, %v1227
        %v1736 = vsel %vm1725, %v1703, %v1229
        %v1737 = vsel %vm1725, %v1704, %v1231
        %v1738 = vsel %vm1725, %v1705, %v1233
        %v1739 = vsel %vm1725, %v1706, %v1235
        %v1740 = vsel %vm1725, %v1707, %v1237
        %v1741 = vsel %vm1725, %v1708, %v1239
        %v1742 = vsel %vm1725, %v1709, %v1241
        %v1743 = vsel %vm1725, %v1710, %v1243
        %v1744 = vsel %vm1725, %v1711, %v1245
        %v1745 = vsel %vm1725, %v1712, %v1247
        %v1746 = vsel %vm1725, %v1713, %v1249
        %v1747 = vsel %vm1725, %v1714, %v1251
        %v1748 = vsel %vm1725, %v1715, %v1253
        %v1749 = vsel %vm1725, %v1716, %v1255
        %v1750 = vsel %vm1725, %v1717, %v1257
        %v1751 = vsel %vm1725, %v1718, %v1259
        %v1752 = vsel %vm1725, %v1719, %v1261
        %v1753 = vsel %vm1725, %v1720, %v1263
        %v1754 = vsel %vm1725, %v1721, %v1265
        %v1755 = vsel %vm1725, %v1722, %v1267
        %v1756 = vsel %vm1725, %v1723, %v1269
        %v1757 = vsel %vm1725, %v1724, %v1271
        %vm1758 = vcmask 171008
        %v1759 = vsel %vm1758, %v1726, %v1337
        %v1760 = vsel %vm1758, %v1727, %v1339
        %v1761 = vsel %vm1758, %v1728, %v1341
        %v1762 = vsel %vm1758, %v1729, %v1343
        %v1763 = vsel %vm1758, %v1730, %v1345
        %v1764 = vsel %vm1758, %v1731, %v1347
        %v1765 = vsel %vm1758, %v1732, %v1349
        %v1766 = vsel %vm1758, %v1733, %v1351
        %v1767 = vsel %vm1758, %v1734, %v1353
        %v1768 = vsel %vm1758, %v1735, %v1355
        %v1769 = vsel %vm1758, %v1736, %v1357
        %v1770 = vsel %vm1758, %v1737, %v1359
        %v1771 = vsel %vm1758, %v1738, %v1361
        %v1772 = vsel %vm1758, %v1739, %v1363
        %v1773 = vsel %vm1758, %v1740, %v1365
        %v1774 = vsel %vm1758, %v1741, %v1367
        %v1775 = vsel %vm1758, %v1742, %v1369
        %v1776 = vsel %vm1758, %v1743, %v1371
        %v1777 = vsel %vm1758, %v1744, %v1373
        %v1778 = vsel %vm1758, %v1745, %v1375
        %v1779 = vsel %vm1758, %v1746, %v1377
        %v1780 = vsel %vm1758, %v1747, %v1379
        %v1781 = vsel %vm1758, %v1748, %v1381
        %v1782 = vsel %vm1758, %v1749, %v1383
        %v1783 = vsel %vm1758, %v1750, %v1385
        %v1784 = vsel %vm1758, %v1751, %v1387
        %v1785 = vsel %vm1758, %v1752, %v1389
        %v1786 = vsel %vm1758, %v1753, %v1391
        %v1787 = vsel %vm1758, %v1754, %v1393
        %v1788 = vsel %vm1758, %v1755, %v1395
        %v1789 = vsel %vm1758, %v1756, %v1397
        %v1790 = vsel %vm1758, %v1757, %v1399
        %vm1791 = vcmask 195584
        %v1792 = vsel %vm1791, %v1759, %v1465
        %v1793 = vsel %vm1791, %v1760, %v1467
        %v1794 = vsel %vm1791, %v1761, %v1469
        %v1795 = vsel %vm1791, %v1762, %v1471
        %v1796 = vsel %vm1791, %v1763, %v1473
        %v1797 = vsel %vm1791, %v1764, %v1475
        %v1798 = vsel %vm1791, %v1765, %v1477
        %v1799 = vsel %vm1791, %v1766, %v1479
        %v1800 = vsel %vm1791, %v1767, %v1481
        %v1801 = vsel %vm1791, %v1768, %v1483
        %v1802 = vsel %vm1791, %v1769, %v1485
        %v1803 = vsel %vm1791, %v1770, %v1487
        %v1804 = vsel %vm1791, %v1771, %v1489
        %v1805 = vsel %vm1791, %v1772, %v1491
        %v1806 = vsel %vm1791, %v1773, %v1493
        %v1807 = vsel %vm1791, %v1774, %v1495
        %v1808 = vsel %vm1791, %v1775, %v1497
        %v1809 = vsel %vm1791, %v1776, %v1499
        %v1810 = vsel %vm1791, %v1777, %v1501
        %v1811 = vsel %vm1791, %v1778, %v1503
        %v1812 = vsel %vm1791, %v1779, %v1505
        %v1813 = vsel %vm1791, %v1780, %v1507
        %v1814 = vsel %vm1791, %v1781, %v1509
        %v1815 = vsel %vm1791, %v1782, %v1511
        %v1816 = vsel %vm1791, %v1783, %v1513
        %v1817 = vsel %vm1791, %v1784, %v1515
        %v1818 = vsel %vm1791, %v1785, %v1517
        %v1819 = vsel %vm1791, %v1786, %v1519
        %v1820 = vsel %vm1791, %v1787, %v1521
        %v1821 = vsel %vm1791, %v1788, %v1523
        %v1822 = vsel %vm1791, %v1789, %v1525
        %v1823 = vsel %vm1791, %v1790, %v1527
        %v1824 = vpack.c.bf16 %v1793, %v1792
        %v1825 = vpack.c.bf16 %v1795, %v1794
        %v1826 = vpack.c.bf16 %v1797, %v1796
        %v1827 = vpack.c.bf16 %v1799, %v1798
        %v1828 = vpack.c.bf16 %v1801, %v1800
        %v1829 = vpack.c.bf16 %v1803, %v1802
        %v1830 = vpack.c.bf16 %v1805, %v1804
        %v1831 = vpack.c.bf16 %v1807, %v1806
        %v1832 = vpack.c.bf16 %v1809, %v1808
        %v1833 = vpack.c.bf16 %v1811, %v1810
        %v1834 = vpack.c.bf16 %v1813, %v1812
        %v1835 = vpack.c.bf16 %v1815, %v1814
        %v1836 = vpack.c.bf16 %v1817, %v1816
        %v1837 = vpack.c.bf16 %v1819, %v1818
        %v1838 = vpack.c.bf16 %v1821, %v1820
        %v1839 = vpack.c.bf16 %v1823, %v1822
        %v1840 = vld [vmem:[%s1] sm:$0xf]
        %v1841 = vld [vmem:[%s1 + $0x4] sm:$0xf]
        %v1842 = vld [vmem:[%s1 + $0x8] sm:$0xf]
        %v1843 = vld [vmem:[%s1 + $0xc] sm:$0x3]
        %v1844 = vld [vmem:[%s2] sm:$0x1]
        %v1846 = vperm.slane %v1844, 0
        %v1852 = vunpack.c.l.b16 %v1840
        %v1853 = vunpack.c.l.b16 %v1841
        %v1854 = vunpack.c.l.b16 %v1842
        %v1855 = vunpack.c.l.b16 %v1843
        %v1856 = vpack.c.b16 %v1853, %v1852
        %v1857 = vpack.c.b16 %v1855, %v1854
        %vm1859 = vcmask 220160
        %v1861 = vsel %vm1859, %v1824, 0
        %v1864 = vsel %vm1859, %v1825, 0
        %v1867 = vsel %vm1859, %v1826, 0
        %v1870 = vsel %vm1859, %v1827, 0
        %v1873 = vsel %vm1859, %v1828, 0
        %v1876 = vsel %vm1859, %v1829, 0
        %v1879 = vsel %vm1859, %v1830, 0
        %v1882 = vsel %vm1859, %v1831, 0
        %v1885 = vsel %vm1859, %v1832, 0
        %v1888 = vsel %vm1859, %v1833, 0
        %v1891 = vsel %vm1859, %v1834, 0
        %v1894 = vsel %vm1859, %v1835, 0
        %v1897 = vsel %vm1859, %v1836, 0
        %v1900 = vsel %vm1859, %v1837, 0
        %v1903 = vsel %vm1859, %v1838, 0
        %v1906 = vsel %vm1859, %v1839, 0
        %vm1908 = vcmask 1044480
        %vm1909 = vcmask 1045504
        %v1910 = vsel %vm1908, 4294967295, 65535
        %v1911 = vsel %vm1909, %v1910, 0
        %v1913 = vand.u32 %v1857, %v1911
        %1915 = vmatpush.bf16.msra.mxu0 0
        %1916 = vmatpush.bf16.msra.mxu0 0
        %1917 = vmatpush.bf16.msra.mxu0 0
        %1918 = vmatpush.bf16.msra.mxu0 0
        %1919 = vmatpush.bf16.msra.mxu0 0
        %1920 = vmatpush.bf16.msra.mxu0 0
        %1921 = vmatpush.bf16.msra.mxu0 %v1913
        %1922 = vmatpush.bf16.msra.mxu0 %v1856
        %1923 = vmatmul.bf16.gmra.mxu0 %v1861
        %v1924 = vpop.f32.mrf.mxu0
        %v1925 = vadd.f32 %v1846, %v1924
        %v1926 = vpop.f32.mrf.mxu0
        %v1927 = vadd.f32 %v1846, %v1926
        %1928 = vmatmul.bf16.gmra.mxu0 %v1864
        %v1929 = vpop.f32.mrf.mxu0
        %v1930 = vadd.f32 %v1846, %v1929
        %v1931 = vpop.f32.mrf.mxu0
        %v1932 = vadd.f32 %v1846, %v1931
        %1933 = vmatmul.bf16.gmra.mxu0 %v1867
        %v1934 = vpop.f32.mrf.mxu0
        %v1935 = vadd.f32 %v1846, %v1934
        %v1936 = vpop.f32.mrf.mxu0
        %v1937 = vadd.f32 %v1846, %v1936
        %1938 = vmatmul.bf16.gmra.mxu0 %v1870
        %v1939 = vpop.f32.mrf.mxu0
        %v1940 = vadd.f32 %v1846, %v1939
        %v1941 = vpop.f32.mrf.mxu0
        %v1942 = vadd.f32 %v1846, %v1941
        %1943 = vmatmul.bf16.gmra.mxu0 %v1873
        %v1944 = vpop.f32.mrf.mxu0
        %v1945 = vadd.f32 %v1846, %v1944
        %v1946 = vpop.f32.mrf.mxu0
        %v1947 = vadd.f32 %v1846, %v1946
        %1948 = vmatmul.bf16.gmra.mxu0 %v1876
        %v1949 = vpop.f32.mrf.mxu0
        %v1950 = vadd.f32 %v1846, %v1949
        %v1951 = vpop.f32.mrf.mxu0
        %v1952 = vadd.f32 %v1846, %v1951
        %1953 = vmatmul.bf16.gmra.mxu0 %v1879
        %v1954 = vpop.f32.mrf.mxu0
        %v1955 = vadd.f32 %v1846, %v1954
        %v1956 = vpop.f32.mrf.mxu0
        %v1957 = vadd.f32 %v1846, %v1956
        %1958 = vmatmul.bf16.gmra.mxu0 %v1882
        %v1959 = vpop.f32.mrf.mxu0
        %v1960 = vadd.f32 %v1846, %v1959
        %v1961 = vpop.f32.mrf.mxu0
        %v1962 = vadd.f32 %v1846, %v1961
        %1963 = vmatmul.bf16.gmra.mxu0 %v1885
        %v1964 = vpop.f32.mrf.mxu0
        %v1965 = vadd.f32 %v1846, %v1964
        %v1966 = vpop.f32.mrf.mxu0
        %v1967 = vadd.f32 %v1846, %v1966
        %1968 = vmatmul.bf16.gmra.mxu0 %v1888
        %v1969 = vpop.f32.mrf.mxu0
        %v1970 = vadd.f32 %v1846, %v1969
        %v1971 = vpop.f32.mrf.mxu0
        %v1972 = vadd.f32 %v1846, %v1971
        %1973 = vmatmul.bf16.gmra.mxu0 %v1891
        %v1974 = vpop.f32.mrf.mxu0
        %v1975 = vadd.f32 %v1846, %v1974
        %v1976 = vpop.f32.mrf.mxu0
        %v1977 = vadd.f32 %v1846, %v1976
        %1978 = vmatmul.bf16.gmra.mxu0 %v1894
        %v1979 = vpop.f32.mrf.mxu0
        %v1980 = vadd.f32 %v1846, %v1979
        %v1981 = vpop.f32.mrf.mxu0
        %v1982 = vadd.f32 %v1846, %v1981
        %1983 = vmatmul.bf16.gmra.mxu0 %v1897
        %v1984 = vpop.f32.mrf.mxu0
        %v1985 = vadd.f32 %v1846, %v1984
        %v1986 = vpop.f32.mrf.mxu0
        %v1987 = vadd.f32 %v1846, %v1986
        %1988 = vmatmul.bf16.gmra.mxu0 %v1900
        %v1989 = vpop.f32.mrf.mxu0
        %v1990 = vadd.f32 %v1846, %v1989
        %v1991 = vpop.f32.mrf.mxu0
        %v1992 = vadd.f32 %v1846, %v1991
        %1993 = vmatmul.bf16.gmra.mxu0 %v1903
        %v1994 = vpop.f32.mrf.mxu0
        %v1995 = vadd.f32 %v1846, %v1994
        %v1996 = vpop.f32.mrf.mxu0
        %v1997 = vadd.f32 %v1846, %v1996
        %1998 = vmatmul.bf16.gmra.mxu0 %v1906
        %v1999 = vpop.f32.mrf.mxu0
        %v2000 = vadd.f32 %v1846, %v1999
        %v2001 = vpop.f32.mrf.mxu0
        %v2002 = vadd.f32 %v1846, %v2001
        %2003 = vdwg.mxu0
        %v2004 = vmax.f32 %v1925, 0.0
        %v2005 = vmax.f32 %v1927, 0.0
        %v2006 = vmax.f32 %v1930, 0.0
        %v2007 = vmax.f32 %v1932, 0.0
        %v2008 = vmax.f32 %v1935, 0.0
        %v2009 = vmax.f32 %v1937, 0.0
        %v2010 = vmax.f32 %v1940, 0.0
        %v2011 = vmax.f32 %v1942, 0.0
        %v2012 = vmax.f32 %v1945, 0.0
        %v2013 = vmax.f32 %v1947, 0.0
        %v2014 = vmax.f32 %v1950, 0.0
        %v2015 = vmax.f32 %v1952, 0.0
        %v2016 = vmax.f32 %v1955, 0.0
        %v2017 = vmax.f32 %v1957, 0.0
        %v2018 = vmax.f32 %v1960, 0.0
        %v2019 = vmax.f32 %v1962, 0.0
        %v2020 = vmax.f32 %v1965, 0.0
        %v2021 = vmax.f32 %v1967, 0.0
        %v2022 = vmax.f32 %v1970, 0.0
        %v2023 = vmax.f32 %v1972, 0.0
        %v2024 = vmax.f32 %v1975, 0.0
        %v2025 = vmax.f32 %v1977, 0.0
        %v2026 = vmax.f32 %v1980, 0.0
        %v2027 = vmax.f32 %v1982, 0.0
        %v2028 = vmax.f32 %v1985, 0.0
        %v2029 = vmax.f32 %v1987, 0.0
        %v2030 = vmax.f32 %v1990, 0.0
        %v2031 = vmax.f32 %v1992, 0.0
        %v2032 = vmax.f32 %v1995, 0.0
        %v2033 = vmax.f32 %v1997, 0.0
        %v2034 = vmax.f32 %v2000, 0.0
        %v2035 = vmax.f32 %v2002, 0.0
        %v2036 = vpack.c.bf16 %v2005, %v2004
        %v2037 = vpack.c.bf16 %v2007, %v2006
        %v2038 = vpack.c.bf16 %v2009, %v2008
        %v2039 = vpack.c.bf16 %v2011, %v2010
        %v2040 = vpack.c.bf16 %v2013, %v2012
        %v2041 = vpack.c.bf16 %v2015, %v2014
        %v2042 = vpack.c.bf16 %v2017, %v2016
        %v2043 = vpack.c.bf16 %v2019, %v2018
        %v2044 = vpack.c.bf16 %v2021, %v2020
        %v2045 = vpack.c.bf16 %v2023, %v2022
        %v2046 = vpack.c.bf16 %v2025, %v2024
        %v2047 = vpack.c.bf16 %v2027, %v2026
        %v2048 = vpack.c.bf16 %v2029, %v2028
        %v2049 = vpack.c.bf16 %v2031, %v2030
        %v2050 = vpack.c.bf16 %v2033, %v2032
        %v2051 = vpack.c.bf16 %v2035, %v2034
        %v2052 = vld [vmem:[%s3] sm:$0xf]
        %v2053 = vld [vmem:[%s3 + $0x4] sm:$0xf]
        %v2054 = vld [vmem:[%s4] sm:$0xff]
        %v2055 = vld [vmem:[%s4 + $0x8] sm:$0xff]
        %2057 = vset.pattern.permute.xlu0 0
        %2058 = vperm.xlu0 %2057, %v2054
        %v2059 = vpop.permute.xlu0 %2058
        %2062 = vset.pattern.permute.xlu0 0
        %2063 = vperm.xlu0 %2062, %v2055
        %v2064 = vpop.permute.xlu0 %2063
        %v2068 = vunpack.c.l.b16 %v2052
        %v2069 = vunpack.c.l.b16 %v2053
        %v2070 = vpack.c.b16 %v2069, %v2068
        %vm2071 = vcmask 261120
        %v2073 = vsel %vm2071, %v2070, 0
        %v2076 = vsel %vm2071, %v2036, 0
        %v2079 = vsel %vm2071, %v2037, 0
        %v2082 = vsel %vm2071, %v2038, 0
        %v2085 = vsel %vm2071, %v2039, 0
        %v2088 = vsel %vm2071, %v2040, 0
        %v2091 = vsel %vm2071, %v2041, 0
        %v2094 = vsel %vm2071, %v2042, 0
        %v2097 = vsel %vm2071, %v2043, 0
        %v2100 = vsel %vm2071, %v2044, 0
        %v2103 = vsel %vm2071, %v2045, 0
        %v2106 = vsel %vm2071, %v2046, 0
        %v2109 = vsel %vm2071, %v2047, 0
        %v2112 = vsel %vm2071, %v2048, 0
        %v2115 = vsel %vm2071, %v2049, 0
        %v2118 = vsel %vm2071, %v2050, 0
        %v2121 = vsel %vm2071, %v2051, 0
        %2123 = vmatpush.bf16.xpose.msra.mxu0 %v2097
        %2124 = vmatpush.bf16.xpose.msra.mxu0 %v2094
        %2125 = vmatpush.bf16.xpose.msra.mxu0 %v2091
        %2126 = vmatpush.bf16.xpose.msra.mxu0 %v2088
        %2127 = vmatpush.bf16.xpose.msra.mxu0 %v2085
        %2128 = vmatpush.bf16.xpose.msra.mxu0 %v2082
        %2129 = vmatpush.bf16.xpose.msra.mxu0 %v2079
        %2130 = vmatpush.bf16.xpose.msra.mxu0 %v2076
        %2131 = vmatmul.bf16.gmra.mxu0 %v2073
        %v2132 = vpop.f32.mrf.mxu0
        %v2133 = vadd.f32 %v2059, %v2132
        %v2134 = vpop.f32.mrf.mxu0
        %v2135 = vadd.f32 %v2064, %v2134
        %2136 = vdwg.mxu0
        %2137 = vmatpush.bf16.xpose.msra.mxu0 %v2121
        %2138 = vmatpush.bf16.xpose.msra.mxu0 %v2118
        %2139 = vmatpush.bf16.xpose.msra.mxu0 %v2115
        %2140 = vmatpush.bf16.xpose.msra.mxu0 %v2112
        %2141 = vmatpush.bf16.xpose.msra.mxu0 %v2109
        %2142 = vmatpush.bf16.xpose.msra.mxu0 %v2106
        %2143 = vmatpush.bf16.xpose.msra.mxu0 %v2103
        %2144 = vmatpush.bf16.xpose.msra.mxu0 %v2100
        %2145 = vmatmul.bf16.gmra.mxu0 %v2073
        %v2146 = vpop.f32.mrf.mxu0
        %v2147 = vadd.f32 %v2059, %v2146
        %v2148 = vpop.f32.mrf.mxu0
        %v2149 = vadd.f32 %v2064, %v2148
        %2150 = vdwg.mxu0
        %2151 = vst [vmem:[%s231] sm:$0xff] %v2133
        %2152 = vst [vmem:[%s231 + $0x8] sm:$0xff] %v2147
        %2153 = vst [vmem:[%s231 + $0x10] sm:$0xff] %v2135
        %2154 = vst [vmem:[%s231 + $0x18] sm:$0xff] %v2149
        %s2155 = sand.u32 %s151, 1
        %s2156 = scalar_lea.sflag [#allocation3], %s2155
        %s2157 = sand.u32 %s151, 1
        %s2158 = smul.addr %s2157, 32
        %s2159 = scalar_lea.vmem [#allocation2], %s2158
        // Predicated region
        $region41: #{tpu_custom_call.1} parent=39 // pred_check
          %p2160 = pneg %p161
        $region42: #{tpu_custom_call.1} parent=39 // pred_check_branch
          %2162 = sbr.rel (%p2160) target = $region44
        $region43: #{tpu_custom_call.1} parent=39 // pred_region
          %s2163 = smul.u32 2, %s24
          %2165 = vsyncadd %s2156, 0
          %s2166 = smul.addr %s23, 4
          %s2167 = sadd.s32 %s2163, %s2166
          %s2168 = smul.addr %s2167, 8
          %s2169 = scalar_lea.hbm %s5, %s2168
          %s2170 = sshll.u32 %s2159, 4
          %s2171 = int_to_ptr.vmem [resolvable:$true] %s2170
          %s2172 = sshll.u32 %s2169, 4
          %s2173 = int_to_ptr.hbm [resolvable:$true] %s2172
          %2178 = dma.vmem_to_hbm [thread:$0]  %s2171, 512, %s2173, %s2156, 256, 256, 16
        $region44: #{tpu_custom_call.1} parent=39 // pred_fallthru
          _
      $region40: #{tpu_custom_call.1} parent=5 // pred_fallthru
        _
      %p2179 = scmp.le.s32.totalorder 2, %s14
      // Predicated region
      $region45: #{tpu_custom_call.1} parent=5 // pred_check
        %p2180 = pneg %p2179
      $region46: #{tpu_custom_call.1} parent=5 // pred_check_branch
        %2182 = sbr.rel (%p2180) target = $region48
      $region47: #{tpu_custom_call.1} parent=5 // pred_region
        %s2183 = ssub.s32 %s14, 2
        // Predicated region
        $region49: #{tpu_custom_call.1} parent=47 // pred_check
          %p2184 = pneg %p167
        $region50: #{tpu_custom_call.1} parent=47 // pred_check_branch
          %2186 = sbr.rel (%p2184) target = $region52
        $region51: #{tpu_custom_call.1} parent=47 // pred_region
          %s2187 = sand.u32 %s152, 1
          %s2188 = scalar_lea.sflag [#allocation3], %s2187
          %s2189 = sand.u32 %s152, 1
          %s2190 = smul.addr %s2189, 32
          %s2191 = scalar_lea.vmem [#allocation2], %s2190
          %2193 = dma.done %s2188, 512
        $region52: #{tpu_custom_call.1} parent=47 // pred_fallthru
          _
      $region48: #{tpu_custom_call.1} parent=5 // pred_fallthru
        _
    $region6: #{tpu_custom_call.1} parent=1 // loop_footer
      %s18 = sadd.s32 1, %s14
    $region7: #{tpu_custom_call.1} parent=1 // loop_footer_branch
      %13 = sbr.rel target = $region3
    $region8: #{tpu_custom_call.1} parent=1 // loop_exit
      _
    %2194 = vsyncpa [#allocation3], 1
    %s2195 = scalar_lea.sflag [#allocation3], 1
    %2196 = vsyncpa %s2195, 1

</llo_original>
